<compile_context>
chip_gen: v7x
topology: tpu7x:2x2x1
jax: 0.10.0
libtpu: 0.0.40
codegen_flags: <defaults>
</compile_context>

<pallas_src>
import functools
import math

import jax
import jax.numpy as jnp
from jax.experimental import pallas as pl
from jax.experimental.pallas import tpu as pltpu


_MXU_DTYPE = jnp.bfloat16   # MXU-native on v5e/v6e/v7x; f32 accumulation below.


def _round_up(v, m):
    return ((v + m - 1) // m) * m


def _pad_cast(x, rows, cols, dtype):
    """Cast to `dtype` and zero-pad a 2-D array up to (rows, cols)."""
    r, c = x.shape
    x = x.astype(dtype)
    if rows != r or cols != c:
        x = jnp.pad(x, ((0, rows - r), (0, cols - c)))
    return x


def _fit_rows(x, rows):
    """Slice or zero-pad the leading dim of a padded operand to `rows`."""
    r = x.shape[0]
    if r > rows:
        return x[:rows]
    if r < rows:
        return jnp.pad(x, ((0, rows - r), (0, 0)))
    return x


def _choose_tiles(M, K, tm, tk):
    """Tile sizes (multiples of (8, 128)) + padded dims for an (M,K) LHS."""
    tm_eff = min(tm, _round_up(M, 8))
    tk_eff = min(tk, _round_up(K, 128))
    # v7x megacore: the row axis is the only "parallel" grid axis; make sure
    # it has at least two tiles so both TensorCores get work.
    if M > 8 and _round_up(M, tm_eff) // tm_eff < 2:
        tm_eff = min(tm_eff, _round_up(-(-M // 2), 8))
    Mp = _round_up(M, tm_eff)
    Kp = _round_up(K, tk_eff)
    return tm_eff, tk_eff, Mp, Kp


def _mm_kernel(*refs, act, fuse_w2):
    """One (tm, tk) x (tk, Fp) step of a K-tiled matmul.

    f32 VMEM accumulator persists across the k grid axis.  Final-k epilogue
    optionally applies an activation and a fused projection by a VMEM-resident
    W2 tile before the lane-dense writeback.
    """
    if fuse_w2:
        a_ref, b_ref, w2_ref, o_ref, acc_ref = refs
    else:
        a_ref, b_ref, o_ref, acc_ref = refs
        w2_ref = None

    k = pl.program_id(1)
    partial = jnp.dot(a_ref[...], b_ref[...], preferred_element_type=jnp.float32)

    @pl.when(k == 0)
    def _():
        acc_ref[...] = partial          # first k writes directly (no zero-init pass)

    @pl.when(k != 0)
    def _():
        acc_ref[...] = acc_ref[...] + partial

    @pl.when(k == pl.num_programs(1) - 1)
    def _():
        out = acc_ref[...]
        if act == "relu":
            out = jnp.maximum(out, 0.0)
        elif act == "sigmoid":
            out = pl.reciprocal(1.0 + jnp.exp(-out), approx=True)
        if fuse_w2:
            out = jnp.dot(out.astype(w2_ref.dtype), w2_ref[...],
                          preferred_element_type=jnp.float32)
        o_ref[...] = out.astype(o_ref.dtype)


def _matmul_padded(a_p, b_p, *, tm, tk, act=None, w2_p=None,
                   out_dtype=jnp.float32):
    """out = [act](a_p @ b_p) [@ w2_p] on already padded/cast operands.

    a_p: (Mp, Kp), b_p: (Kp, Fp), optional resident w2_p: (Fp, F2p).
    Returns the padded (Mp, Fp or F2p) result (caller slices).
    """
    Mp, Kp = a_p.shape
    Kb, Fp = b_p.shape
    assert Kp == Kb, (a_p.shape, b_p.shape)
    assert Mp % tm == 0 and Kp % tk == 0, (Mp, Kp, tm, tk)

    fuse_w2 = w2_p is not None
    out_cols = w2_p.shape[1] if fuse_w2 else Fp
    grid = (Mp // tm, Kp // tk)

    in_specs = [
        pl.BlockSpec((tm, tk), lambda i, k: (i, k)),
        pl.BlockSpec((tk, Fp), lambda i, k: (k, 0)),
    ]
    operands = [a_p, b_p]
    if fuse_w2:
        in_specs.append(pl.BlockSpec((Fp, out_cols), lambda i, k: (0, 0)))
        operands.append(w2_p)

    # VMEM footprint, counted once: double-buffered a/b/out tiles, f32
    # accumulator, resident (double-buffered) W2.  Headroom for compiler
    # scratch; cap below v7x's 64 MiB physical per-TC VMEM.
    in_bytes = jnp.dtype(_MXU_DTYPE).itemsize
    out_bytes = jnp.dtype(out_dtype).itemsize
    footprint = (2 * tm * tk * in_bytes
                 + 2 * tk * Fp * in_bytes
                 + 2 * tm * out_cols * out_bytes
                 + tm * Fp * 4)
    if fuse_w2:
        footprint += 2 * Fp * out_cols * in_bytes
    vmem_limit = int(min(max(footprint + (8 << 20), 32 << 20), 56 << 20))

    return pl.pallas_call(
        functools.partial(_mm_kernel, act=act, fuse_w2=fuse_w2),
        out_shape=jax.ShapeDtypeStruct((Mp, out_cols), out_dtype),
        grid_spec=pltpu.PrefetchScalarGridSpec(
            num_scalar_prefetch=0,
            grid=grid,
            in_specs=in_specs,
            out_specs=pl.BlockSpec((tm, out_cols), lambda i, k: (i, 0)),
            scratch_shapes=[pltpu.VMEM((tm, Fp), jnp.float32)],
        ),
        compiler_params=pltpu.CompilerParams(
            dimension_semantics=("parallel", "arbitrary"),
            vmem_limit_bytes=vmem_limit,
        ),
    )(*operands)


def pallas_matmul(a, b, *, act=None, w2=None, out_dtype=jnp.float32,
                  tm=512, tk=1024):
    """Convenience wrapper: pads/casts operands, runs the kernel, slices."""
    M, K = a.shape
    Kb, F = b.shape
    assert K == Kb, (a.shape, b.shape)
    tm_eff, tk_eff, Mp, Kp = _choose_tiles(M, K, tm, tk)
    Fp = _round_up(F, 128)
    a_p = _pad_cast(a, Mp, Kp, _MXU_DTYPE)
    b_p = _pad_cast(b, Kp, Fp, _MXU_DTYPE)
    w2_p = None
    out_F = F
    if w2 is not None:
        out_F = w2.shape[1]
        w2_p = _pad_cast(w2, Fp, _round_up(out_F, 128), _MXU_DTYPE)
    out_p = _matmul_padded(a_p, b_p, tm=tm_eff, tk=tk_eff, act=act,
                           w2_p=w2_p, out_dtype=out_dtype)
    return out_p[:M, :out_F]


def gcn_without_d_forward(adj, x, degree, w1, w2, *, act="relu",
                          use_degree=False, tm=512, tk=1024):
    """GCN_without_D.forward (eval mode: dropout = identity)."""
    assert act in ("relu", "sigmoid")
    N = adj.shape[0]
    infea, hidden = w1.shape
    hidden2, outfea = w2.shape
    assert hidden2 == hidden

    if use_degree:
        # torch: mm(mm(mm(mm(degree**0.5, adj), adj), x), W) per layer; the
        # propagation matrix is identical for both layers, compute it once.
        prop = pallas_matmul(jnp.sqrt(degree), adj, tm=tm, tk=tk)
        prop = pallas_matmul(prop, adj, tm=tm, tk=tk)
        mid1 = pallas_matmul(prop, x, tm=tm, tk=tk)
        h = pallas_matmul(mid1, w1, act=act, tm=tm, tk=tk)
        # TODO(synk): nn.Dropout(0.5) is identity in eval mode; training-mode
        # dropout (PRNG mask + 1/(1-p) scaling) is not implemented in-kernel.
        mid2 = pallas_matmul(prop, h, tm=tm, tk=tk)
        return pallas_matmul(mid2, w2, tm=tm, tk=tk)

    # ---- use_degree=False (the GCN_without_D configuration) ----
    # Re-associated dataflow (3 kernels, 2 adj streams):
    #   xw1 = x @ W1
    #   g   = act(adj @ xw1) @ W2     (W2 projection fused into the epilogue)
    #   out = adj @ g
    tm_a, tk_a, Mp, Kp = _choose_tiles(N, N, tm, tk)

    # Hoisted: cast/pad adj to bf16 once, reused by both adj matmuls.
    adj_p = _pad_cast(adj, Mp, Kp, _MXU_DTYPE)

    infea_p = _round_up(infea, 128)
    hidden_p = _round_up(hidden, 128)
    outfea_p = _round_up(outfea, 128)

    # (1) xw1 = x @ W1; rows padded straight to Kp so it feeds the adj matmul
    #     with no extra copy.  Tiny matmul -> modest tiles that divide evenly.
    x_p = _pad_cast(x, Kp, infea_p, _MXU_DTYPE)
    w1_p = _pad_cast(w1, infea_p, hidden_p, _MXU_DTYPE)
    tm_s = math.gcd(Kp, 128)               # Kp is a multiple of 128
    tk_s = math.gcd(infea_p, 512)
    xw1_p = _matmul_padded(x_p, w1_p, tm=tm_s, tk=tk_s, act=None,
                           out_dtype=_MXU_DTYPE)          # (Kp, hidden_p) bf16

    # (2) g = act(adj @ xw1) @ W2, projection fused into the final-k epilogue
    #     (W2 is a few tens of KiB and stays VMEM-resident).  Zero-padding of
    #     W2's rows guarantees padded hidden columns contribute nothing, so
    #     this is safe for both relu and sigmoid.
    w2_p = _pad_cast(w2, hidden_p, outfea_p, _MXU_DTYPE)
    g_p = _matmul_padded(adj_p, xw1_p, tm=tm_a, tk=tk_a, act=act,
                         w2_p=w2_p, out_dtype=_MXU_DTYPE)   # (Mp, outfea_p)
    # TODO(synk): training-mode dropout on the layer-1 activation is not
    # implemented (eval mode identity only).

    # (3) out = adj @ g  (columns of adj beyond N are zero, so any padded rows
    #     of g contribute nothing).
    g_p = _fit_rows(g_p, Kp)
    out_p = _matmul_padded(adj_p, g_p, tm=tm_a, tk=tk_a, act=None,
                           out_dtype=jnp.float32)           # (Mp, outfea_p)
    return out_p[:N, :outfea]


if __name__ == "__main__":
    # Small shapes consistent with the module: N nodes, infea -> hidden -> outfea.
    N, infea, hidden, outfea = 256, 64, 128, 32

    key = jax.random.PRNGKey(0)
    k_adj, k_x, k_w1, k_w2 = jax.random.split(key, 4)

    adj = jax.random.uniform(k_adj, (N, N), dtype=jnp.float32)
    x = jax.random.uniform(k_x, (N, infea), dtype=jnp.float32)
    # torch.rand-style uniform [0, 1) parameter init.
    w1 = jax.random.uniform(k_w1, (infea, hidden), dtype=jnp.float32)
    w2 = jax.random.uniform(k_w2, (hidden, outfea), dtype=jnp.float32)
    degree = None  # GCN_without_D: use_degree=False path

    fwd = jax.jit(functools.partial(gcn_without_d_forward, act="relu",
                                    use_degree=False))
    out = jax.block_until_ready(fwd(adj, x, degree, w1, w2))

    # Pure-JAX f32 reference (eval mode: dropout = identity).
    h_ref = jnp.maximum(adj @ x @ w1, 0.0)
    ref = adj @ h_ref @ w2

    assert out.shape == (N, outfea), out.shape
    rel_err = float(jnp.max(jnp.abs(out - ref) / jnp.maximum(jnp.abs(ref), 1.0)))
    assert rel_err < 3e-2, rel_err   # bf16 inputs + f32 accumulation

    print("KERNEL_OK")
</pallas_src>

<mosaic_0001>
module attributes {stable_mosaic.version = 11 : i64} {
  func.func @_mm_kernel(%arg0: i32, %arg1: i32, %arg2: memref<128x128xbf16, #tpu.memory_space<vmem>>, %arg3: memref<128x128xbf16, #tpu.memory_space<vmem>>, %arg4: memref<128x128xbf16, #tpu.memory_space<vmem>>, %arg5: memref<128x128xf32, #tpu.memory_space<vmem>>) attributes {dimension_semantics = [#tpu.dimension_semantics<parallel>, #tpu.dimension_semantics<arbitrary>], iteration_bounds = array<i64: 2, 1>, scalar_prefetch = 0 : i64, scratch_operands = 1 : i64, tpu.core_type = #tpu.core_type<tc>, window_params = [{transform_indices = @transform_0, window_bounds = array<i64: 128, 128>}, {transform_indices = @transform_1, window_bounds = array<i64: 128, 128>}, {transform_indices = @transform_2, window_bounds = array<i64: 128, 128>}]} {
    %c0 = arith.constant 0 : index
    %c0_0 = arith.constant 0 : index
    %0 = vector.load %arg2[%c0, %c0_0] : memref<128x128xbf16, #tpu.memory_space<vmem>>, vector<128x128xbf16>
    %c0_1 = arith.constant 0 : index
    %c0_2 = arith.constant 0 : index
    %1 = vector.load %arg3[%c0_1, %c0_2] : memref<128x128xbf16, #tpu.memory_space<vmem>>, vector<128x128xbf16>
    %cst = arith.constant dense<0.000000e+00> : vector<128x128xf32>
    %2 = tpu.matmul %0, %1, %cst {dimension_numbers = #tpu.dot_dimension_numbers<[1], [0], [0], [1], [0, 0, 1, 1], [], []>} : vector<128x128xbf16>, vector<128x128xbf16>, vector<128x128xf32> -> vector<128x128xf32>
    %c0_i32 = arith.constant 0 : i32
    %3 = arith.cmpi eq, %arg1, %c0_i32 : i32
    %4 = arith.extui %3 : i1 to i32
    %c0_i32_3 = arith.constant 0 : i32
    %5 = arith.cmpi ne, %4, %c0_i32_3 : i32
    scf.if %5 {
      %c0_8 = arith.constant 0 : index
      %c0_9 = arith.constant 0 : index
      %12 = vector.load %arg5[%c0_8, %c0_9] : memref<128x128xf32, #tpu.memory_space<vmem>>, vector<128x128xf32>
      tpu.vector_store %arg5[%c0_8, %c0_9], %2 {strides = array<i32>} : memref<128x128xf32, #tpu.memory_space<vmem>>, vector<128x128xf32>,
    } else {
    }
    %c0_i32_4 = arith.constant 0 : i32
    %6 = arith.cmpi ne, %arg1, %c0_i32_4 : i32
    %7 = arith.extui %6 : i1 to i32
    %c0_i32_5 = arith.constant 0 : i32
    %8 = arith.cmpi ne, %7, %c0_i32_5 : i32
    scf.if %8 {
      %c0_8 = arith.constant 0 : index
      %c0_9 = arith.constant 0 : index
      %12 = vector.load %arg5[%c0_8, %c0_9] : memref<128x128xf32, #tpu.memory_space<vmem>>, vector<128x128xf32>
      %13 = arith.addf %12, %2 : vector<128x128xf32>
      %c0_10 = arith.constant 0 : index
      %c0_11 = arith.constant 0 : index
      %14 = vector.load %arg5[%c0_10, %c0_11] : memref<128x128xf32, #tpu.memory_space<vmem>>, vector<128x128xf32>
      tpu.vector_store %arg5[%c0_10, %c0_11], %13 {strides = array<i32>} : memref<128x128xf32, #tpu.memory_space<vmem>>, vector<128x128xf32>,
    } else {
    }
    %c0_i32_6 = arith.constant 0 : i32
    %9 = arith.cmpi eq, %arg1, %c0_i32_6 : i32
    %10 = arith.extui %9 : i1 to i32
    %c0_i32_7 = arith.constant 0 : i32
    %11 = arith.cmpi ne, %10, %c0_i32_7 : i32
    scf.if %11 {
      %c0_8 = arith.constant 0 : index
      %c0_9 = arith.constant 0 : index
      %12 = vector.load %arg5[%c0_8, %c0_9] : memref<128x128xf32, #tpu.memory_space<vmem>>, vector<128x128xf32>
      %13 = arith.truncf %12 : vector<128x128xf32> to vector<128x128xbf16>
      %c0_10 = arith.constant 0 : index
      %c0_11 = arith.constant 0 : index
      %14 = vector.load %arg4[%c0_10, %c0_11] : memref<128x128xbf16, #tpu.memory_space<vmem>>, vector<128x128xbf16>
      tpu.vector_store %arg4[%c0_10, %c0_11], %13 {strides = array<i32>} : memref<128x128xbf16, #tpu.memory_space<vmem>>, vector<128x128xbf16>,
    } else {
    }
    return
  }
  func.func @transform_0(%arg0: i32, %arg1: i32) -> (i32, i32) {
    %c0_i32 = arith.constant 0 : i32
    return %arg0, %arg1 : i32, i32
  }
  func.func @transform_1(%arg0: i32, %arg1: i32) -> (i32, i32) {
    %c0_i32 = arith.constant 0 : i32
    %c0_i32_0 = arith.constant 0 : i32
    return %arg1, %c0_i32 : i32, i32
  }
  func.func @transform_2(%arg0: i32, %arg1: i32) -> (i32, i32) {
    %c0_i32 = arith.constant 0 : i32
    %c0_i32_0 = arith.constant 0 : i32
    return %arg0, %c0_i32 : i32, i32
  }
}

module attributes {stable_mosaic.version = 11 : i64} {
  func.func @_mm_kernel(%arg0: i32, %arg1: i32, %arg2: memref<128x256xbf16, #tpu.memory_space<vmem>>, %arg3: memref<256x128xbf16, #tpu.memory_space<vmem>>, %arg4: memref<128x128xf32, #tpu.memory_space<vmem>>, %arg5: memref<128x128xf32, #tpu.memory_space<vmem>>) attributes {dimension_semantics = [#tpu.dimension_semantics<parallel>, #tpu.dimension_semantics<arbitrary>], iteration_bounds = array<i64: 2, 1>, scalar_prefetch = 0 : i64, scratch_operands = 1 : i64, tpu.core_type = #tpu.core_type<tc>, window_params = [{transform_indices = @transform_0, window_bounds = array<i64: 128, 256>}, {transform_indices = @transform_1, window_bounds = array<i64: 256, 128>}, {transform_indices = @transform_2, window_bounds = array<i64: 128, 128>}]} {
    %c0 = arith.constant 0 : index
    %c0_0 = arith.constant 0 : index
    %0 = vector.load %arg2[%c0, %c0_0] : memref<128x256xbf16, #tpu.memory_space<vmem>>, vector<128x256xbf16>
    %c0_1 = arith.constant 0 : index
    %c0_2 = arith.constant 0 : index
    %1 = vector.load %arg3[%c0_1, %c0_2] : memref<256x128xbf16, #tpu.memory_space<vmem>>, vector<256x128xbf16>
    %cst = arith.constant dense<0.000000e+00> : vector<128x128xf32>
    %2 = tpu.matmul %0, %1, %cst {dimension_numbers = #tpu.dot_dimension_numbers<[1], [0], [0], [1], [0, 0, 1, 1], [], []>} : vector<128x256xbf16>, vector<256x128xbf16>, vector<128x128xf32> -> vector<128x128xf32>
    %c0_i32 = arith.constant 0 : i32
    %3 = arith.cmpi eq, %arg1, %c0_i32 : i32
    %4 = arith.extui %3 : i1 to i32
    %c0_i32_3 = arith.constant 0 : i32
    %5 = arith.cmpi ne, %4, %c0_i32_3 : i32
    scf.if %5 {
      %c0_8 = arith.constant 0 : index
      %c0_9 = arith.constant 0 : index
      %12 = vector.load %arg5[%c0_8, %c0_9] : memref<128x128xf32, #tpu.memory_space<vmem>>, vector<128x128xf32>
      tpu.vector_store %arg5[%c0_8, %c0_9], %2 {strides = array<i32>} : memref<128x128xf32, #tpu.memory_space<vmem>>, vector<128x128xf32>,
    } else {
    }
    %c0_i32_4 = arith.constant 0 : i32
    %6 = arith.cmpi ne, %arg1, %c0_i32_4 : i32
    %7 = arith.extui %6 : i1 to i32
    %c0_i32_5 = arith.constant 0 : i32
    %8 = arith.cmpi ne, %7, %c0_i32_5 : i32
    scf.if %8 {
      %c0_8 = arith.constant 0 : index
      %c0_9 = arith.constant 0 : index
      %12 = vector.load %arg5[%c0_8, %c0_9] : memref<128x128xf32, #tpu.memory_space<vmem>>, vector<128x128xf32>
      %13 = arith.addf %12, %2 : vector<128x128xf32>
      %c0_10 = arith.constant 0 : index
      %c0_11 = arith.constant 0 : index
      %14 = vector.load %arg5[%c0_10, %c0_11] : memref<128x128xf32, #tpu.memory_space<vmem>>, vector<128x128xf32>
      tpu.vector_store %arg5[%c0_10, %c0_11], %13 {strides = array<i32>} : memref<128x128xf32, #tpu.memory_space<vmem>>, vector<128x128xf32>,
    } else {
    }
    %c0_i32_6 = arith.constant 0 : i32
    %9 = arith.cmpi eq, %arg1, %c0_i32_6 : i32
    %10 = arith.extui %9 : i1 to i32
    %c0_i32_7 = arith.constant 0 : i32
    %11 = arith.cmpi ne, %10, %c0_i32_7 : i32
    scf.if %11 {
      %c0_8 = arith.constant 0 : index
      %c0_9 = arith.constant 0 : index
      %12 = vector.load %arg5[%c0_8, %c0_9] : memref<128x128xf32, #tpu.memory_space<vmem>>, vector<128x128xf32>
      %c0_10 = arith.constant 0 : index
      %c0_11 = arith.constant 0 : index
      %13 = vector.load %arg4[%c0_10, %c0_11] : memref<128x128xf32, #tpu.memory_space<vmem>>, vector<128x128xf32>
      tpu.vector_store %arg4[%c0_10, %c0_11], %12 {strides = array<i32>} : memref<128x128xf32, #tpu.memory_space<vmem>>, vector<128x128xf32>,
    } else {
    }
    return
  }
  func.func @transform_0(%arg0: i32, %arg1: i32) -> (i32, i32) {
    %c0_i32 = arith.constant 0 : i32
    return %arg0, %arg1 : i32, i32
  }
  func.func @transform_1(%arg0: i32, %arg1: i32) -> (i32, i32) {
    %c0_i32 = arith.constant 0 : i32
    %c0_i32_0 = arith.constant 0 : i32
    return %arg1, %c0_i32 : i32, i32
  }
  func.func @transform_2(%arg0: i32, %arg1: i32) -> (i32, i32) {
    %c0_i32 = arith.constant 0 : i32
    %c0_i32_0 = arith.constant 0 : i32
    return %arg0, %c0_i32 : i32, i32
  }
}

module attributes {stable_mosaic.version = 11 : i64} {
  func.func @_mm_kernel(%arg0: i32, %arg1: i32, %arg2: memref<128x256xbf16, #tpu.memory_space<vmem>>, %arg3: memref<256x128xbf16, #tpu.memory_space<vmem>>, %arg4: memref<128x128xbf16, #tpu.memory_space<vmem>>, %arg5: memref<128x128xbf16, #tpu.memory_space<vmem>>, %arg6: memref<128x128xf32, #tpu.memory_space<vmem>>) attributes {dimension_semantics = [#tpu.dimension_semantics<parallel>, #tpu.dimension_semantics<arbitrary>], iteration_bounds = array<i64: 2, 1>, scalar_prefetch = 0 : i64, scratch_operands = 1 : i64, tpu.core_type = #tpu.core_type<tc>, window_params = [{transform_indices = @transform_0, window_bounds = array<i64: 128, 256>}, {transform_indices = @transform_1, window_bounds = array<i64: 256, 128>}, {pipeline_mode = #tpu.pipeline_mode<synchronous>, transform_indices = @transform_2, window_bounds = array<i64: 128, 128>}, {transform_indices = @transform_3, window_bounds = array<i64: 128, 128>}]} {
    %c0 = arith.constant 0 : index
    %c0_0 = arith.constant 0 : index
    %0 = vector.load %arg2[%c0, %c0_0] : memref<128x256xbf16, #tpu.memory_space<vmem>>, vector<128x256xbf16>
    %c0_1 = arith.constant 0 : index
    %c0_2 = arith.constant 0 : index
    %1 = vector.load %arg3[%c0_1, %c0_2] : memref<256x128xbf16, #tpu.memory_space<vmem>>, vector<256x128xbf16>
    %cst = arith.constant dense<0.000000e+00> : vector<128x128xf32>
    %2 = tpu.matmul %0, %1, %cst {dimension_numbers = #tpu.dot_dimension_numbers<[1], [0], [0], [1], [0, 0, 1, 1], [], []>} : vector<128x256xbf16>, vector<256x128xbf16>, vector<128x128xf32> -> vector<128x128xf32>
    %c0_i32 = arith.constant 0 : i32
    %3 = arith.cmpi eq, %arg1, %c0_i32 : i32
    %4 = arith.extui %3 : i1 to i32
    %c0_i32_3 = arith.constant 0 : i32
    %5 = arith.cmpi ne, %4, %c0_i32_3 : i32
    scf.if %5 {
      %c0_8 = arith.constant 0 : index
      %c0_9 = arith.constant 0 : index
      %12 = vector.load %arg6[%c0_8, %c0_9] : memref<128x128xf32, #tpu.memory_space<vmem>>, vector<128x128xf32>
      tpu.vector_store %arg6[%c0_8, %c0_9], %2 {strides = array<i32>} : memref<128x128xf32, #tpu.memory_space<vmem>>, vector<128x128xf32>,
    } else {
    }
    %c0_i32_4 = arith.constant 0 : i32
    %6 = arith.cmpi ne, %arg1, %c0_i32_4 : i32
    %7 = arith.extui %6 : i1 to i32
    %c0_i32_5 = arith.constant 0 : i32
    %8 = arith.cmpi ne, %7, %c0_i32_5 : i32
    scf.if %8 {
      %c0_8 = arith.constant 0 : index
      %c0_9 = arith.constant 0 : index
      %12 = vector.load %arg6[%c0_8, %c0_9] : memref<128x128xf32, #tpu.memory_space<vmem>>, vector<128x128xf32>
      %13 = arith.addf %12, %2 : vector<128x128xf32>
      %c0_10 = arith.constant 0 : index
      %c0_11 = arith.constant 0 : index
      %14 = vector.load %arg6[%c0_10, %c0_11] : memref<128x128xf32, #tpu.memory_space<vmem>>, vector<128x128xf32>
      tpu.vector_store %arg6[%c0_10, %c0_11], %13 {strides = array<i32>} : memref<128x128xf32, #tpu.memory_space<vmem>>, vector<128x128xf32>,
    } else {
    }
    %c0_i32_6 = arith.constant 0 : i32
    %9 = arith.cmpi eq, %arg1, %c0_i32_6 : i32
    %10 = arith.extui %9 : i1 to i32
    %c0_i32_7 = arith.constant 0 : i32
    %11 = arith.cmpi ne, %10, %c0_i32_7 : i32
    scf.if %11 {
      %c0_8 = arith.constant 0 : index
      %c0_9 = arith.constant 0 : index
      %12 = vector.load %arg6[%c0_8, %c0_9] : memref<128x128xf32, #tpu.memory_space<vmem>>, vector<128x128xf32>
      %cst_10 = arith.constant 0.000000e+00 : f32
      %13 = vector.broadcast %cst_10 : f32 to vector<128x128xf32>
      %14 = arith.maximumf %12, %13 : vector<128x128xf32>
      %15 = arith.truncf %14 : vector<128x128xf32> to vector<128x128xbf16>
      %c0_11 = arith.constant 0 : index
      %c0_12 = arith.constant 0 : index
      %16 = vector.load %arg4[%c0_11, %c0_12] : memref<128x128xbf16, #tpu.memory_space<vmem>>, vector<128x128xbf16>
      %cst_13 = arith.constant dense<0.000000e+00> : vector<128x128xf32>
      %17 = tpu.matmul %15, %16, %cst_13 {dimension_numbers = #tpu.dot_dimension_numbers<[1], [0], [0], [1], [0, 0, 1, 1], [], []>} : vector<128x128xbf16>, vector<128x128xbf16>, vector<128x128xf32> -> vector<128x128xf32>
      %18 = arith.truncf %17 : vector<128x128xf32> to vector<128x128xbf16>
      %c0_14 = arith.constant 0 : index
      %c0_15 = arith.constant 0 : index
      %19 = vector.load %arg5[%c0_14, %c0_15] : memref<128x128xbf16, #tpu.memory_space<vmem>>, vector<128x128xbf16>
      tpu.vector_store %arg5[%c0_14, %c0_15], %18 {strides = array<i32>} : memref<128x128xbf16, #tpu.memory_space<vmem>>, vector<128x128xbf16>,
    } else {
    }
    return
  }
  func.func @transform_0(%arg0: i32, %arg1: i32) -> (i32, i32) {
    %c0_i32 = arith.constant 0 : i32
    return %arg0, %arg1 : i32, i32
  }
  func.func @transform_1(%arg0: i32, %arg1: i32) -> (i32, i32) {
    %c0_i32 = arith.constant 0 : i32
    %c0_i32_0 = arith.constant 0 : i32
    return %arg1, %c0_i32 : i32, i32
  }
  func.func @transform_2(%arg0: i32, %arg1: i32) -> (i32, i32) {
    %c0_i32 = arith.constant 0 : i32
    %c0_i32_0 = arith.constant 0 : i32
    %c0_i32_1 = arith.constant 0 : i32
    return %c0_i32, %c0_i32_0 : i32, i32
  }
  func.func @transform_3(%arg0: i32, %arg1: i32) -> (i32, i32) {
    %c0_i32 = arith.constant 0 : i32
    %c0_i32_0 = arith.constant 0 : i32
    return %arg0, %c0_i32 : i32, i32
  }
}

</mosaic_0001>

<llo_original>
// kernel: gcn_without_d_forward.5
$region0: #{gcn_without_d_forward.5}
  #allocation0 [shape = 'u32[]', space=smem, size = 0x4, offset = 0x4, fixed_abs, tag = 'smem constant byte address 0x4 - core index']
  #allocation1 [shape = 'u32[144,128]{1,0:T(1,128)}', space=vmem, size = 0x12000, scoped, tag = 'internal scratch']
  #allocation2 [shape = 'f32[128,128]{1,0:T(8,128)}', space=vmem, size = 0x10000, scoped, tag = 'scratch operand']
  %s0 = inlined_call_operand.vmem [shape: bf16[256,256], index: 0, kind: input, shape index: {}]
  %s1 = inlined_call_operand.vmem [shape: bf16[256,128], index: 1, kind: input, shape index: {}]
  %s2 = inlined_call_operand.vmem [shape: f32[256,128], index: 2, kind: output, shape index: {}]
  %s3 = sld [smem:[#allocation0]]
  $region53: #{gcn_without_d_forward.5} parent=0
    _
  %s5 = ssub.s32 1, %s3
  %s6 = scalar_select 0, %s5, %s3
  loop: start=0, step=1, limit=4
  $region2: #{gcn_without_d_forward.5} parent=0 // loop_pre_header
    _
  $region3: #{gcn_without_d_forward.5} parent=0 // loop_header
    %s8 = sphi 0, %s12
    %p9 = scmp.ge.s32.totalorder %s8, 4
    %s15 = sphi 0, %s27
    %s16 = sphi 0, %s23
    %s17 = sphi 0, %s15
    %s18 = sphi 0, %s16
    %s19 = sphi 0, %s17
    %s20 = sphi 0, %s18
    %s32 = sphi 0, %s34
    %s35 = sphi 0, %s32
    %s36 = sphi 0, %s35
    %s52 = sphi 0, %s36
    %s58 = sphi 0, %s60
    %s61 = sphi 0, %s58
    %s62 = sphi 0, %s61
    %s78 = sphi 0, %s62
    %s84 = sphi 0, %s86
    %s87 = sphi 0, %s84
    %s88 = sphi 0, %s87
    %s104 = sphi 0, %s88
  $region4: #{gcn_without_d_forward.5} parent=0 // loop_header_branch
    %11 = sbr.rel (%p9) target = $region8
  $region5: #{gcn_without_d_forward.5} parent=0 // loop_body
    %s13 = ssub.s32 %s8, 1
    %s14 = ssub.s32 %s8, 2
    %s21 = sadd.s32 1, %s16
    %p22 = scmp.ge.s32.totalorder %s21, 1
    %s23 = scalar_select %p22, 0, %s21
    %s24 = sadd.s32 1, %s15
    %s25 = scalar_select %p22, %s24, %s15
    %p26 = scmp.ge.s32.totalorder %s25, 2
    %s27 = scalar_select %p26, 0, %s25
    %s28 = ssub.s32 %s15, %s27
    %s29 = ssub.s32 %s16, %s23
    %s30 = sor.u32 %s28, %s29
    %p31 = scmp.eq.s32.totalorder %s30, 0
    %s33 = sadd.s32 %s32, 1
    %s34 = scalar_select %p31, %s32, %s33
    %p37 = pneg %p31
    %p38 = scmp.eq.s32.totalorder %s8, 1
    %p39 = por %p37, %p38
    %p40 = scmp.ne.s32.totalorder %s32, %s35
    %p41 = scmp.eq.s32.totalorder %s8, 0
    %p42 = por %p40, %p41
    %p43 = scmp.ne.s32.totalorder %s32, %s35
    %p44 = scmp.eq.s32.totalorder %s13, 1
    %p45 = por %p43, %p44
    %p46 = scmp.ne.s32.totalorder %s35, %s36
    %p47 = scmp.eq.s32.totalorder %s13, 0
    %p48 = por %p46, %p47
    %p49 = scmp.ne.s32.totalorder %s35, %s36
    %p50 = scmp.eq.s32.totalorder %s14, 1
    %p51 = por %p49, %p50
    %p53 = scmp.ne.s32.totalorder %s36, %s52
    %p54 = scmp.eq.s32.totalorder %s14, 0
    %p55 = por %p53, %p54
    %s56 = ssub.s32 %s16, %s23
    %p57 = scmp.eq.s32.totalorder %s56, 0
    %s59 = sadd.s32 %s58, 1
    %s60 = scalar_select %p57, %s58, %s59
    %p63 = pneg %p57
    %p64 = scmp.eq.s32.totalorder %s8, 1
    %p65 = por %p63, %p64
    %p66 = scmp.ne.s32.totalorder %s58, %s61
    %p67 = scmp.eq.s32.totalorder %s8, 0
    %p68 = por %p66, %p67
    %p69 = scmp.ne.s32.totalorder %s58, %s61
    %p70 = scmp.eq.s32.totalorder %s13, 1
    %p71 = por %p69, %p70
    %p72 = scmp.ne.s32.totalorder %s61, %s62
    %p73 = scmp.eq.s32.totalorder %s13, 0
    %p74 = por %p72, %p73
    %p75 = scmp.ne.s32.totalorder %s61, %s62
    %p76 = scmp.eq.s32.totalorder %s14, 1
    %p77 = por %p75, %p76
    %p79 = scmp.ne.s32.totalorder %s62, %s78
    %p80 = scmp.eq.s32.totalorder %s14, 0
    %p81 = por %p79, %p80
    %s82 = ssub.s32 %s15, %s27
    %p83 = scmp.eq.s32.totalorder %s82, 0
    %s85 = sadd.s32 %s84, 1
    %s86 = scalar_select %p83, %s84, %s85
    %p89 = pneg %p83
    %p90 = scmp.eq.s32.totalorder %s8, 1
    %p91 = por %p89, %p90
    %p92 = scmp.ne.s32.totalorder %s84, %s87
    %p93 = scmp.eq.s32.totalorder %s8, 0
    %p94 = por %p92, %p93
    %p95 = scmp.ne.s32.totalorder %s84, %s87
    %p96 = scmp.eq.s32.totalorder %s13, 1
    %p97 = por %p95, %p96
    %p98 = scmp.ne.s32.totalorder %s87, %s88
    %p99 = scmp.eq.s32.totalorder %s13, 0
    %p100 = por %p98, %p99
    %p101 = scmp.ne.s32.totalorder %s87, %s88
    %p102 = scmp.eq.s32.totalorder %s14, 1
    %p103 = por %p101, %p102
    %p105 = scmp.ne.s32.totalorder %s88, %s104
    %p106 = scmp.eq.s32.totalorder %s14, 0
    %p107 = por %p105, %p106
    %p108 = scmp.le.s32.totalorder 1, %s8
    %p109 = scmp.lt.s32.totalorder %s8, 3
    %p110 = pnand %p108, %p109
    %p111 = pneg %p110
    // Predicated region
    $region9: #{gcn_without_d_forward.5} parent=5 // pred_check
      _
    $region10: #{gcn_without_d_forward.5} parent=5 // pred_check_branch
      %113 = sbr.rel (%p110) target = $region12
    $region11: #{gcn_without_d_forward.5} parent=5 // pred_region
      %s114 = ssub.s32 %s8, 1
      // Predicated region
      $region13: #{gcn_without_d_forward.5} parent=11 // pred_check
        %p115 = pneg %p74
      $region14: #{gcn_without_d_forward.5} parent=11 // pred_check_branch
        %117 = sbr.rel (%p115) target = $region16
      $region15: #{gcn_without_d_forward.5} parent=11 // pred_region
        %s118 = smul.u32 32, %s18
        %p119 = scmp.lt.s32.totalorder %s118, 31
        %s120 = scalar_select %p119, %s118, 31
        %s121 = smul.addr %s120, 4
        %s122 = scalar_lea.vmem %s1, %s121
        %s123 = smul.u32 32, %s18
      $region16: #{gcn_without_d_forward.5} parent=11 // pred_fallthru
        _
    $region12: #{gcn_without_d_forward.5} parent=5 // pred_fallthru
      _
    %p124 = scmp.lt.s32.totalorder %s8, 2
    // Predicated region
    $region17: #{gcn_without_d_forward.5} parent=5 // pred_check
      %p125 = pneg %p124
    $region18: #{gcn_without_d_forward.5} parent=5 // pred_check_branch
      %127 = sbr.rel (%p125) target = $region20
    $region19: #{gcn_without_d_forward.5} parent=5 // pred_region
      // Predicated region
      $region21: #{gcn_without_d_forward.5} parent=19 // pred_check
        %p128 = pneg %p42
      $region22: #{gcn_without_d_forward.5} parent=19 // pred_check_branch
        %130 = sbr.rel (%p128) target = $region24
      $region23: #{gcn_without_d_forward.5} parent=19 // pred_region
        %s131 = smul.u32 16, %s15
        %s132 = smul.u32 2, %s16
        %p133 = scmp.lt.s32.totalorder %s131, 31
        %s134 = scalar_select %p133, %s131, 31
        %p135 = scmp.lt.s32.totalorder %s132, 1
        %s136 = scalar_select %p135, %s132, 1
        %s137 = smul.addr %s134, 2
        %s138 = sadd.s32 %s136, %s137
        %s139 = smul.addr %s138, 4
        %s140 = scalar_lea.vmem %s0, %s139
        %s141 = smul.u32 16, %s15
        %s142 = smul.u32 2, %s16
      $region24: #{gcn_without_d_forward.5} parent=19 // pred_fallthru
        _
    $region20: #{gcn_without_d_forward.5} parent=5 // pred_fallthru
      _
    %p143 = scmp.le.s32.totalorder 1, %s8
    %p144 = scmp.lt.s32.totalorder %s8, 3
    %p145 = pnand %p143, %p144
    %p146 = pneg %p145
    // Predicated region
    $region25: #{gcn_without_d_forward.5} parent=5 // pred_check
      _
    $region26: #{gcn_without_d_forward.5} parent=5 // pred_check_branch
      %148 = sbr.rel (%p145) target = $region28
    $region27: #{gcn_without_d_forward.5} parent=5 // pred_region
      %s149 = ssub.s32 %s8, 1
      %s150 = smul.u32 16, %s17
      %s151 = smul.u32 2, %s18
      %p152 = scmp.lt.s32.totalorder %s150, 31
      %s153 = scalar_select %p152, %s150, 31
      %p154 = scmp.lt.s32.totalorder %s151, 1
      %s155 = scalar_select %p154, %s151, 1
      %s156 = smul.addr %s153, 2
      %s157 = sadd.s32 %s155, %s156
      %s158 = smul.addr %s157, 4
      %s159 = scalar_lea.vmem %s0, %s158
      %p160 = pneg %p48
      %p161 = pneg %p45
      %s162 = smul.u32 32, %s18
      %p163 = scmp.lt.s32.totalorder %s162, 31
      %s164 = scalar_select %p163, %s162, 31
      %s165 = smul.addr %s164, 4
      %s166 = scalar_lea.vmem %s1, %s165
      %p167 = pneg %p74
      %p168 = pneg %p71
      %p169 = pneg %p100
      %p170 = pneg %p97
      %s171 = smul.u32 16, %s17
      %p172 = scmp.lt.s32.totalorder %s171, 31
      %s173 = scalar_select %p172, %s171, 31
      %s174 = smul.addr %s173, 8
      %s175 = scalar_lea.vmem %s2, %s174
      %s176 = smul.u32 16, %s17
      %s177 = smul.u32 2, %s18
      %p178 = scmp.lt.s32.totalorder %s176, 31
      %s179 = scalar_select %p178, %s176, 31
      %p180 = scmp.lt.s32.totalorder %s177, 1
      %s181 = scalar_select %p180, %s177, 1
      %s182 = smul.addr %s179, 2
      %s183 = sadd.s32 %s181, %s182
      %s184 = smul.addr %s183, 4
      %s185 = scalar_lea.vmem %s0, %s184
      %s186 = smul.u32 16, %s17
      %s187 = smul.u32 2, %s18
      %s188 = smul.u32 32, %s18
      %p189 = scmp.lt.s32.totalorder %s188, 31
      %s190 = scalar_select %p189, %s188, 31
      %s191 = smul.addr %s190, 4
      %s192 = scalar_lea.vmem %s1, %s191
      %s193 = smul.u32 32, %s18
      %s194 = smul.u32 16, %s17
      %p195 = scmp.lt.s32.totalorder %s194, 31
      %s196 = scalar_select %p195, %s194, 31
      %s197 = smul.addr %s196, 8
      %s198 = scalar_lea.vmem %s2, %s197
      %s199 = smul.u32 16, %s17
      %v201 = vld [vmem:[%s185] sm:$0xff]
      %v202 = vld [vmem:[%s185 + $0x8] sm:$0xff]
      %v203 = vld [vmem:[%s185 + $0x10] sm:$0xff]
      %v204 = vld [vmem:[%s185 + $0x18] sm:$0xff]
      %v205 = vld [vmem:[%s185 + $0x20] sm:$0xff]
      %v206 = vld [vmem:[%s185 + $0x28] sm:$0xff]
      %v207 = vld [vmem:[%s185 + $0x30] sm:$0xff]
      %v208 = vld [vmem:[%s185 + $0x38] sm:$0xff]
      %v209 = vld [vmem:[%s185 + $0x40] sm:$0xff]
      %v210 = vld [vmem:[%s185 + $0x48] sm:$0xff]
      %v211 = vld [vmem:[%s185 + $0x50] sm:$0xff]
      %v212 = vld [vmem:[%s185 + $0x58] sm:$0xff]
      %v213 = vld [vmem:[%s185 + $0x60] sm:$0xff]
      %v214 = vld [vmem:[%s185 + $0x68] sm:$0xff]
      %v215 = vld [vmem:[%s185 + $0x70] sm:$0xff]
      %v216 = vld [vmem:[%s185 + $0x78] sm:$0xff]
      %v217 = vld [vmem:[%s192] sm:$0xf]
      %v218 = vld [vmem:[%s192 + $0x4] sm:$0xf]
      %v219 = vld [vmem:[%s192 + $0x8] sm:$0xf]
      %v220 = vld [vmem:[%s192 + $0xc] sm:$0xf]
      %v221 = vld [vmem:[%s192 + $0x10] sm:$0xf]
      %v222 = vld [vmem:[%s192 + $0x14] sm:$0xf]
      %v223 = vld [vmem:[%s192 + $0x18] sm:$0xf]
      %v224 = vld [vmem:[%s192 + $0x1c] sm:$0xf]
      %v225 = vld [vmem:[%s192 + $0x20] sm:$0xf]
      %v226 = vld [vmem:[%s192 + $0x24] sm:$0xf]
      %v227 = vld [vmem:[%s192 + $0x28] sm:$0xf]
      %v228 = vld [vmem:[%s192 + $0x2c] sm:$0xf]
      %v229 = vld [vmem:[%s192 + $0x30] sm:$0xf]
      %v230 = vld [vmem:[%s192 + $0x34] sm:$0xf]
      %v231 = vld [vmem:[%s192 + $0x38] sm:$0xf]
      %v232 = vld [vmem:[%s192 + $0x3c] sm:$0xf]
      %v233 = vld [vmem:[%s192 + $0x40] sm:$0xf]
      %v234 = vld [vmem:[%s192 + $0x44] sm:$0xf]
      %v235 = vld [vmem:[%s192 + $0x48] sm:$0xf]
      %v236 = vld [vmem:[%s192 + $0x4c] sm:$0xf]
      %v237 = vld [vmem:[%s192 + $0x50] sm:$0xf]
      %v238 = vld [vmem:[%s192 + $0x54] sm:$0xf]
      %v239 = vld [vmem:[%s192 + $0x58] sm:$0xf]
      %v240 = vld [vmem:[%s192 + $0x5c] sm:$0xf]
      %v241 = vld [vmem:[%s192 + $0x60] sm:$0xf]
      %v242 = vld [vmem:[%s192 + $0x64] sm:$0xf]
      %v243 = vld [vmem:[%s192 + $0x68] sm:$0xf]
      %v244 = vld [vmem:[%s192 + $0x6c] sm:$0xf]
      %v245 = vld [vmem:[%s192 + $0x70] sm:$0xf]
      %v246 = vld [vmem:[%s192 + $0x74] sm:$0xf]
      %v247 = vld [vmem:[%s192 + $0x78] sm:$0xf]
      %v248 = vld [vmem:[%s192 + $0x7c] sm:$0xf]
      %v265 = vunpack.c.l.b16 %v201
      %v266 = vunpack.c.h.b16 %v201
      %v267 = vunpack.c.l.b16 %v202
      %v268 = vunpack.c.h.b16 %v202
      %v269 = vunpack.c.l.b16 %v203
      %v270 = vunpack.c.h.b16 %v203
      %v271 = vunpack.c.l.b16 %v204
      %v272 = vunpack.c.h.b16 %v204
      %v273 = vunpack.c.l.b16 %v205
      %v274 = vunpack.c.h.b16 %v205
      %v275 = vunpack.c.l.b16 %v206
      %v276 = vunpack.c.h.b16 %v206
      %v277 = vunpack.c.l.b16 %v207
      %v278 = vunpack.c.h.b16 %v207
      %v279 = vunpack.c.l.b16 %v208
      %v280 = vunpack.c.h.b16 %v208
      %v281 = vunpack.c.l.b16 %v209
      %v282 = vunpack.c.h.b16 %v209
      %v283 = vunpack.c.l.b16 %v210
      %v284 = vunpack.c.h.b16 %v210
      %v285 = vunpack.c.l.b16 %v211
      %v286 = vunpack.c.h.b16 %v211
      %v287 = vunpack.c.l.b16 %v212
      %v288 = vunpack.c.h.b16 %v212
      %v289 = vunpack.c.l.b16 %v213
      %v290 = vunpack.c.h.b16 %v213
      %v291 = vunpack.c.l.b16 %v214
      %v292 = vunpack.c.h.b16 %v214
      %v293 = vunpack.c.l.b16 %v215
      %v294 = vunpack.c.h.b16 %v215
      %v295 = vunpack.c.l.b16 %v216
      %v296 = vunpack.c.h.b16 %v216
      %v297 = vpack.c.b16 %v267, %v265
      %v298 = vpack.c.b16 %v268, %v266
      %v299 = vpack.c.b16 %v271, %v269
      %v300 = vpack.c.b16 %v272, %v270
      %v301 = vpack.c.b16 %v275, %v273
      %v302 = vpack.c.b16 %v276, %v274
      %v303 = vpack.c.b16 %v279, %v277
      %v304 = vpack.c.b16 %v280, %v278
      %v305 = vpack.c.b16 %v283, %v281
      %v306 = vpack.c.b16 %v284, %v282
      %v307 = vpack.c.b16 %v287, %v285
      %v308 = vpack.c.b16 %v288, %v286
      %v309 = vpack.c.b16 %v291, %v289
      %v310 = vpack.c.b16 %v292, %v290
      %v311 = vpack.c.b16 %v295, %v293
      %v312 = vpack.c.b16 %v296, %v294
      %v361 = vunpack.c.l.b16 %v217
      %v362 = vunpack.c.l.b16 %v218
      %v363 = vunpack.c.l.b16 %v219
      %v364 = vunpack.c.l.b16 %v220
      %v365 = vunpack.c.l.b16 %v221
      %v366 = vunpack.c.l.b16 %v222
      %v367 = vunpack.c.l.b16 %v223
      %v368 = vunpack.c.l.b16 %v224
      %v369 = vunpack.c.l.b16 %v225
      %v370 = vunpack.c.l.b16 %v226
      %v371 = vunpack.c.l.b16 %v227
      %v372 = vunpack.c.l.b16 %v228
      %v373 = vunpack.c.l.b16 %v229
      %v374 = vunpack.c.l.b16 %v230
      %v375 = vunpack.c.l.b16 %v231
      %v376 = vunpack.c.l.b16 %v232
      %v377 = vunpack.c.l.b16 %v233
      %v378 = vunpack.c.l.b16 %v234
      %v379 = vunpack.c.l.b16 %v235
      %v380 = vunpack.c.l.b16 %v236
      %v381 = vunpack.c.l.b16 %v237
      %v382 = vunpack.c.l.b16 %v238
      %v383 = vunpack.c.l.b16 %v239
      %v384 = vunpack.c.l.b16 %v240
      %v385 = vunpack.c.l.b16 %v241
      %v386 = vunpack.c.l.b16 %v242
      %v387 = vunpack.c.l.b16 %v243
      %v388 = vunpack.c.l.b16 %v244
      %v389 = vunpack.c.l.b16 %v245
      %v390 = vunpack.c.l.b16 %v246
      %v391 = vunpack.c.l.b16 %v247
      %v392 = vunpack.c.l.b16 %v248
      %v393 = vpack.c.b16 %v362, %v361
      %v394 = vpack.c.b16 %v364, %v363
      %v395 = vpack.c.b16 %v366, %v365
      %v396 = vpack.c.b16 %v368, %v367
      %v397 = vpack.c.b16 %v370, %v369
      %v398 = vpack.c.b16 %v372, %v371
      %v399 = vpack.c.b16 %v374, %v373
      %v400 = vpack.c.b16 %v376, %v375
      %v401 = vpack.c.b16 %v378, %v377
      %v402 = vpack.c.b16 %v380, %v379
      %v403 = vpack.c.b16 %v382, %v381
      %v404 = vpack.c.b16 %v384, %v383
      %v405 = vpack.c.b16 %v386, %v385
      %v406 = vpack.c.b16 %v388, %v387
      %v407 = vpack.c.b16 %v390, %v389
      %v408 = vpack.c.b16 %v392, %v391
      %425 = vmatprep.subr.bf16.mxu0 0
      %426 = vmatpush1.bf16.msra.mxu0 %v393
      %427 = vmatprep.subr.bf16.mxu0 0
      %428 = vmatpush1.bf16.msra.mxu0 %v394
      %429 = vmatprep.subr.bf16.mxu0 0
      %430 = vmatpush1.bf16.msra.mxu0 %v395
      %431 = vmatprep.subr.bf16.mxu0 0
      %432 = vmatpush1.bf16.msra.mxu0 %v396
      %433 = vmatprep.subr.bf16.mxu0 0
      %434 = vmatpush1.bf16.msra.mxu0 %v397
      %435 = vmatprep.subr.bf16.mxu0 0
      %436 = vmatpush1.bf16.msra.mxu0 %v398
      %437 = vmatprep.subr.bf16.mxu0 0
      %438 = vmatpush1.bf16.msra.mxu0 %v399
      %439 = vmatprep.subr.bf16.mxu0 0
      %440 = vmatpush1.bf16.msra.mxu0 %v400
      %441 = vmatprep.subr.bf16.mxu0 0
      %442 = vmatpush1.bf16.msra.mxu0 %v401
      %443 = vmatprep.subr.bf16.mxu0 0
      %444 = vmatpush1.bf16.msra.mxu0 %v402
      %445 = vmatprep.subr.bf16.mxu0 0
      %446 = vmatpush1.bf16.msra.mxu0 %v403
      %447 = vmatprep.subr.bf16.mxu0 0
      %448 = vmatpush1.bf16.msra.mxu0 %v404
      %449 = vmatprep.subr.bf16.mxu0 0
      %450 = vmatpush1.bf16.msra.mxu0 %v405
      %451 = vmatprep.subr.bf16.mxu0 0
      %452 = vmatpush1.bf16.msra.mxu0 %v406
      %453 = vmatprep.subr.bf16.mxu0 0
      %454 = vmatpush1.bf16.msra.mxu0 %v407
      %455 = vmatprep.subr.bf16.mxu0 0
      %456 = vmatpush1.bf16.msra.mxu0 %v408
      %457 = vmatprep.mubr.bf16.mxu0 %v298
      %458 = vmatmul.mubr.bf16.gmra.mrb[0].mxu0 %v297
      %v459 = vpop.f32.mrb[0].mxu0
      %v460 = vadd.f32 0.0, %v459
      %v461 = vpop.f32.mrb[0].mxu0
      %v462 = vpop.f32.mrb[0].mxu0
      %v463 = vadd.f32 0.0, %v462
      %v464 = vpop.f32.mrb[0].mxu0
      %465 = vmatprep.mubr.bf16.mxu0 %v300
      %466 = vmatmul.mubr.bf16.gmra.mrb[0].mxu0 %v299
      %v467 = vpop.f32.mrb[0].mxu0
      %v468 = vadd.f32 0.0, %v467
      %v469 = vpop.f32.mrb[0].mxu0
      %v470 = vpop.f32.mrb[0].mxu0
      %v471 = vadd.f32 0.0, %v470
      %v472 = vpop.f32.mrb[0].mxu0
      %473 = vmatprep.mubr.bf16.mxu0 %v302
      %474 = vmatmul.mubr.bf16.gmra.mrb[0].mxu0 %v301
      %v475 = vpop.f32.mrb[0].mxu0
      %v476 = vadd.f32 0.0, %v475
      %v477 = vpop.f32.mrb[0].mxu0
      %v478 = vpop.f32.mrb[0].mxu0
      %v479 = vadd.f32 0.0, %v478
      %v480 = vpop.f32.mrb[0].mxu0
      %481 = vmatprep.mubr.bf16.mxu0 %v304
      %482 = vmatmul.mubr.bf16.gmra.mrb[0].mxu0 %v303
      %v483 = vpop.f32.mrb[0].mxu0
      %v484 = vadd.f32 0.0, %v483
      %v485 = vpop.f32.mrb[0].mxu0
      %v486 = vpop.f32.mrb[0].mxu0
      %v487 = vadd.f32 0.0, %v486
      %v488 = vpop.f32.mrb[0].mxu0
      %489 = vmatprep.mubr.bf16.mxu0 %v306
      %490 = vmatmul.mubr.bf16.gmra.mrb[0].mxu0 %v305
      %v491 = vpop.f32.mrb[0].mxu0
      %v492 = vadd.f32 0.0, %v491
      %v493 = vpop.f32.mrb[0].mxu0
      %v494 = vpop.f32.mrb[0].mxu0
      %v495 = vadd.f32 0.0, %v494
      %v496 = vpop.f32.mrb[0].mxu0
      %497 = vmatprep.mubr.bf16.mxu0 %v308
      %498 = vmatmul.mubr.bf16.gmra.mrb[0].mxu0 %v307
      %v499 = vpop.f32.mrb[0].mxu0
      %v500 = vadd.f32 0.0, %v499
      %v501 = vpop.f32.mrb[0].mxu0
      %v502 = vpop.f32.mrb[0].mxu0
      %v503 = vadd.f32 0.0, %v502
      %v504 = vpop.f32.mrb[0].mxu0
      %505 = vmatprep.mubr.bf16.mxu0 %v310
      %506 = vmatmul.mubr.bf16.gmra.mrb[0].mxu0 %v309
      %v507 = vpop.f32.mrb[0].mxu0
      %v508 = vadd.f32 0.0, %v507
      %v509 = vpop.f32.mrb[0].mxu0
      %v510 = vpop.f32.mrb[0].mxu0
      %v511 = vadd.f32 0.0, %v510
      %v512 = vpop.f32.mrb[0].mxu0
      %513 = vmatprep.mubr.bf16.mxu0 %v312
      %514 = vmatmul.mubr.bf16.gmra.mrb[0].mxu0 %v311
      %v515 = vpop.f32.mrb[0].mxu0
      %v516 = vadd.f32 0.0, %v515
      %v517 = vpop.f32.mrb[0].mxu0
      %v518 = vpop.f32.mrb[0].mxu0
      %v519 = vadd.f32 0.0, %v518
      %v520 = vpop.f32.mrb[0].mxu0
      %521 = vdwg.mxu0
      %p522 = scmp.eq.s32.totalorder %s18, 0
      // Predicated region
      $region29: #{gcn_without_d_forward.5} parent=27 // pred_check
        %p523 = pneg %p522
      $region30: #{gcn_without_d_forward.5} parent=27 // pred_check_branch
        %525 = sbr.rel (%p523) target = $region32
      $region31: #{gcn_without_d_forward.5} parent=27 // pred_region
        %526 = vst [vmem:[#allocation2] sm:$0xff] %v460
        %527 = vst [vmem:[#allocation2 + $0x8] sm:$0xff] %v463
        %528 = vst [vmem:[#allocation2 + $0x10] sm:$0xff] %v468
        %529 = vst [vmem:[#allocation2 + $0x18] sm:$0xff] %v471
        %530 = vst [vmem:[#allocation2 + $0x20] sm:$0xff] %v476
        %531 = vst [vmem:[#allocation2 + $0x28] sm:$0xff] %v479
        %532 = vst [vmem:[#allocation2 + $0x30] sm:$0xff] %v484
        %533 = vst [vmem:[#allocation2 + $0x38] sm:$0xff] %v487
        %534 = vst [vmem:[#allocation2 + $0x40] sm:$0xff] %v492
        %535 = vst [vmem:[#allocation2 + $0x48] sm:$0xff] %v495
        %536 = vst [vmem:[#allocation2 + $0x50] sm:$0xff] %v500
        %537 = vst [vmem:[#allocation2 + $0x58] sm:$0xff] %v503
        %538 = vst [vmem:[#allocation2 + $0x60] sm:$0xff] %v508
        %539 = vst [vmem:[#allocation2 + $0x68] sm:$0xff] %v511
        %540 = vst [vmem:[#allocation2 + $0x70] sm:$0xff] %v516
        %541 = vst [vmem:[#allocation2 + $0x78] sm:$0xff] %v519
      $region32: #{gcn_without_d_forward.5} parent=27 // pred_fallthru
        _
      %p542 = scmp.ne.s32.totalorder %s18, 0
      // Predicated region
      $region33: #{gcn_without_d_forward.5} parent=27 // pred_check
        %p543 = pneg %p542
      $region34: #{gcn_without_d_forward.5} parent=27 // pred_check_branch
        %545 = sbr.rel (%p543) target = $region36
      $region35: #{gcn_without_d_forward.5} parent=27 // pred_region
        %v546 = vld [vmem:[#allocation2] sm:$0xff]
        %v547 = vld [vmem:[#allocation2 + $0x8] sm:$0xff]
        %v548 = vld [vmem:[#allocation2 + $0x10] sm:$0xff]
        %v549 = vld [vmem:[#allocation2 + $0x18] sm:$0xff]
        %v550 = vld [vmem:[#allocation2 + $0x20] sm:$0xff]
        %v551 = vld [vmem:[#allocation2 + $0x28] sm:$0xff]
        %v552 = vld [vmem:[#allocation2 + $0x30] sm:$0xff]
        %v553 = vld [vmem:[#allocation2 + $0x38] sm:$0xff]
        %v554 = vld [vmem:[#allocation2 + $0x40] sm:$0xff]
        %v555 = vld [vmem:[#allocation2 + $0x48] sm:$0xff]
        %v556 = vld [vmem:[#allocation2 + $0x50] sm:$0xff]
        %v557 = vld [vmem:[#allocation2 + $0x58] sm:$0xff]
        %v558 = vld [vmem:[#allocation2 + $0x60] sm:$0xff]
        %v559 = vld [vmem:[#allocation2 + $0x68] sm:$0xff]
        %v560 = vld [vmem:[#allocation2 + $0x70] sm:$0xff]
        %v561 = vld [vmem:[#allocation2 + $0x78] sm:$0xff]
        %v562 = vadd.f32 %v546, %v460
        %v563 = vadd.f32 %v547, %v463
        %v564 = vadd.f32 %v548, %v468
        %v565 = vadd.f32 %v549, %v471
        %v566 = vadd.f32 %v550, %v476
        %v567 = vadd.f32 %v551, %v479
        %v568 = vadd.f32 %v552, %v484
        %v569 = vadd.f32 %v553, %v487
        %v570 = vadd.f32 %v554, %v492
        %v571 = vadd.f32 %v555, %v495
        %v572 = vadd.f32 %v556, %v500
        %v573 = vadd.f32 %v557, %v503
        %v574 = vadd.f32 %v558, %v508
        %v575 = vadd.f32 %v559, %v511
        %v576 = vadd.f32 %v560, %v516
        %v577 = vadd.f32 %v561, %v519
        %578 = vst [vmem:[#allocation2] sm:$0xff] %v562
        %579 = vst [vmem:[#allocation2 + $0x8] sm:$0xff] %v563
        %580 = vst [vmem:[#allocation2 + $0x10] sm:$0xff] %v564
        %581 = vst [vmem:[#allocation2 + $0x18] sm:$0xff] %v565
        %582 = vst [vmem:[#allocation2 + $0x20] sm:$0xff] %v566
        %583 = vst [vmem:[#allocation2 + $0x28] sm:$0xff] %v567
        %584 = vst [vmem:[#allocation2 + $0x30] sm:$0xff] %v568
        %585 = vst [vmem:[#allocation2 + $0x38] sm:$0xff] %v569
        %586 = vst [vmem:[#allocation2 + $0x40] sm:$0xff] %v570
        %587 = vst [vmem:[#allocation2 + $0x48] sm:$0xff] %v571
        %588 = vst [vmem:[#allocation2 + $0x50] sm:$0xff] %v572
        %589 = vst [vmem:[#allocation2 + $0x58] sm:$0xff] %v573
        %590 = vst [vmem:[#allocation2 + $0x60] sm:$0xff] %v574
        %591 = vst [vmem:[#allocation2 + $0x68] sm:$0xff] %v575
        %592 = vst [vmem:[#allocation2 + $0x70] sm:$0xff] %v576
        %593 = vst [vmem:[#allocation2 + $0x78] sm:$0xff] %v577
      $region36: #{gcn_without_d_forward.5} parent=27 // pred_fallthru
        _
      // Predicated region
      $region37: #{gcn_without_d_forward.5} parent=27 // pred_check
        %p594 = pneg %p522
      $region38: #{gcn_without_d_forward.5} parent=27 // pred_check_branch
        %596 = sbr.rel (%p594) target = $region40
      $region39: #{gcn_without_d_forward.5} parent=27 // pred_region
        %v597 = vld [vmem:[#allocation2] sm:$0xff]
        %v598 = vld [vmem:[#allocation2 + $0x8] sm:$0xff]
        %v599 = vld [vmem:[#allocation2 + $0x10] sm:$0xff]
        %v600 = vld [vmem:[#allocation2 + $0x18] sm:$0xff]
        %v601 = vld [vmem:[#allocation2 + $0x20] sm:$0xff]
        %v602 = vld [vmem:[#allocation2 + $0x28] sm:$0xff]
        %v603 = vld [vmem:[#allocation2 + $0x30] sm:$0xff]
        %v604 = vld [vmem:[#allocation2 + $0x38] sm:$0xff]
        %v605 = vld [vmem:[#allocation2 + $0x40] sm:$0xff]
        %v606 = vld [vmem:[#allocation2 + $0x48] sm:$0xff]
        %v607 = vld [vmem:[#allocation2 + $0x50] sm:$0xff]
        %v608 = vld [vmem:[#allocation2 + $0x58] sm:$0xff]
        %v609 = vld [vmem:[#allocation2 + $0x60] sm:$0xff]
        %v610 = vld [vmem:[#allocation2 + $0x68] sm:$0xff]
        %v611 = vld [vmem:[#allocation2 + $0x70] sm:$0xff]
        %v612 = vld [vmem:[#allocation2 + $0x78] sm:$0xff]
        %613 = vst [vmem:[%s198] sm:$0xff] %v597
        %614 = vst [vmem:[%s198 + $0x8] sm:$0xff] %v598
        %615 = vst [vmem:[%s198 + $0x10] sm:$0xff] %v599
        %616 = vst [vmem:[%s198 + $0x18] sm:$0xff] %v600
        %617 = vst [vmem:[%s198 + $0x20] sm:$0xff] %v601
        %618 = vst [vmem:[%s198 + $0x28] sm:$0xff] %v602
        %619 = vst [vmem:[%s198 + $0x30] sm:$0xff] %v603
        %620 = vst [vmem:[%s198 + $0x38] sm:$0xff] %v604
        %621 = vst [vmem:[%s198 + $0x40] sm:$0xff] %v605
        %622 = vst [vmem:[%s198 + $0x48] sm:$0xff] %v606
        %623 = vst [vmem:[%s198 + $0x50] sm:$0xff] %v607
        %624 = vst [vmem:[%s198 + $0x58] sm:$0xff] %v608
        %625 = vst [vmem:[%s198 + $0x60] sm:$0xff] %v609
        %626 = vst [vmem:[%s198 + $0x68] sm:$0xff] %v610
        %627 = vst [vmem:[%s198 + $0x70] sm:$0xff] %v611
        %628 = vst [vmem:[%s198 + $0x78] sm:$0xff] %v612
      $region40: #{gcn_without_d_forward.5} parent=27 // pred_fallthru
        _
      %s629 = smul.u32 16, %s17
      %p630 = scmp.lt.s32.totalorder %s629, 31
      %s631 = scalar_select %p630, %s629, 31
      %s632 = smul.addr %s631, 8
      %s633 = scalar_lea.vmem %s2, %s632
      // Predicated region
      $region41: #{gcn_without_d_forward.5} parent=27 // pred_check
        %p634 = pneg %p97
      $region42: #{gcn_without_d_forward.5} parent=27 // pred_check_branch
        %636 = sbr.rel (%p634) target = $region44
      $region43: #{gcn_without_d_forward.5} parent=27 // pred_region
        %s637 = smul.u32 16, %s17
      $region44: #{gcn_without_d_forward.5} parent=27 // pred_fallthru
        _
    $region28: #{gcn_without_d_forward.5} parent=5 // pred_fallthru
      _
    %p638 = scmp.le.s32.totalorder 2, %s8
    // Predicated region
    $region45: #{gcn_without_d_forward.5} parent=5 // pred_check
      %p639 = pneg %p638
    $region46: #{gcn_without_d_forward.5} parent=5 // pred_check_branch
      %641 = sbr.rel (%p639) target = $region48
    $region47: #{gcn_without_d_forward.5} parent=5 // pred_region
      %s642 = ssub.s32 %s8, 2
      // Predicated region
      $region49: #{gcn_without_d_forward.5} parent=47 // pred_check
        %p643 = pneg %p103
      $region50: #{gcn_without_d_forward.5} parent=47 // pred_check_branch
        %645 = sbr.rel (%p643) target = $region52
      $region51: #{gcn_without_d_forward.5} parent=47 // pred_region
        %s646 = smul.u32 16, %s19
        %p647 = scmp.lt.s32.totalorder %s646, 31
        %s648 = scalar_select %p647, %s646, 31
        %s649 = smul.addr %s648, 8
        %s650 = scalar_lea.vmem %s2, %s649
      $region52: #{gcn_without_d_forward.5} parent=47 // pred_fallthru
        _
    $region48: #{gcn_without_d_forward.5} parent=5 // pred_fallthru
      _
  $region6: #{gcn_without_d_forward.5} parent=0 // loop_footer
    %s12 = sadd.s32 1, %s8
  $region7: #{gcn_without_d_forward.5} parent=0 // loop_footer_branch
    %7 = sbr.rel target = $region3
  $region8: #{gcn_without_d_forward.5} parent=0 // loop_exit
    _

// kernel: gcn_without_d_forward.3
$region0: #{gcn_without_d_forward.3}
  #allocation0 [shape = 'u32[]', space=smem, size = 0x4, offset = 0x4, fixed_abs, tag = 'smem constant byte address 0x4 - core index']
  #allocation1 [shape = 'u32[144,128]{1,0:T(1,128)}', space=vmem, size = 0x12000, scoped, tag = 'internal scratch']
  #allocation2 [shape = 'f32[128,128]{1,0:T(8,128)}', space=vmem, size = 0x10000, scoped, tag = 'scratch operand']
  %s0 = inlined_call_operand.vmem [shape: bf16[256,128], index: 0, kind: input, shape index: {}]
  %s1 = inlined_call_operand.vmem [shape: bf16[128,128], index: 1, kind: input, shape index: {}]
  %s2 = inlined_call_operand.vmem [shape: bf16[256,128], index: 2, kind: output, shape index: {}]
  %s3 = sld [smem:[#allocation0]]
  $region53: #{gcn_without_d_forward.3} parent=0
    _
  %s5 = ssub.s32 1, %s3
  %s6 = scalar_select 0, %s5, %s3
  loop: start=0, step=1, limit=4
  $region2: #{gcn_without_d_forward.3} parent=0 // loop_pre_header
    _
  $region3: #{gcn_without_d_forward.3} parent=0 // loop_header
    %s8 = sphi 0, %s12
    %p9 = scmp.ge.s32.totalorder %s8, 4
    %s15 = sphi 0, %s27
    %s16 = sphi 0, %s23
    %s17 = sphi 0, %s15
    %s18 = sphi 0, %s16
    %s19 = sphi 0, %s17
    %s20 = sphi 0, %s18
    %s32 = sphi 0, %s34
    %s35 = sphi 0, %s32
    %s36 = sphi 0, %s35
    %s52 = sphi 0, %s36
    %s58 = sphi 0, %s60
    %s61 = sphi 0, %s58
    %s62 = sphi 0, %s61
    %s78 = sphi 0, %s62
    %s84 = sphi 0, %s86
    %s87 = sphi 0, %s84
    %s88 = sphi 0, %s87
    %s104 = sphi 0, %s88
  $region4: #{gcn_without_d_forward.3} parent=0 // loop_header_branch
    %11 = sbr.rel (%p9) target = $region8
  $region5: #{gcn_without_d_forward.3} parent=0 // loop_body
    %s13 = ssub.s32 %s8, 1
    %s14 = ssub.s32 %s8, 2
    %s21 = sadd.s32 1, %s16
    %p22 = scmp.ge.s32.totalorder %s21, 1
    %s23 = scalar_select %p22, 0, %s21
    %s24 = sadd.s32 1, %s15
    %s25 = scalar_select %p22, %s24, %s15
    %p26 = scmp.ge.s32.totalorder %s25, 2
    %s27 = scalar_select %p26, 0, %s25
    %s28 = ssub.s32 %s15, %s27
    %s29 = ssub.s32 %s16, %s23
    %s30 = sor.u32 %s28, %s29
    %p31 = scmp.eq.s32.totalorder %s30, 0
    %s33 = sadd.s32 %s32, 1
    %s34 = scalar_select %p31, %s32, %s33
    %p37 = pneg %p31
    %p38 = scmp.eq.s32.totalorder %s8, 1
    %p39 = por %p37, %p38
    %p40 = scmp.ne.s32.totalorder %s32, %s35
    %p41 = scmp.eq.s32.totalorder %s8, 0
    %p42 = por %p40, %p41
    %p43 = scmp.ne.s32.totalorder %s32, %s35
    %p44 = scmp.eq.s32.totalorder %s13, 1
    %p45 = por %p43, %p44
    %p46 = scmp.ne.s32.totalorder %s35, %s36
    %p47 = scmp.eq.s32.totalorder %s13, 0
    %p48 = por %p46, %p47
    %p49 = scmp.ne.s32.totalorder %s35, %s36
    %p50 = scmp.eq.s32.totalorder %s14, 1
    %p51 = por %p49, %p50
    %p53 = scmp.ne.s32.totalorder %s36, %s52
    %p54 = scmp.eq.s32.totalorder %s14, 0
    %p55 = por %p53, %p54
    %s56 = ssub.s32 %s16, %s23
    %p57 = scmp.eq.s32.totalorder %s56, 0
    %s59 = sadd.s32 %s58, 1
    %s60 = scalar_select %p57, %s58, %s59
    %p63 = pneg %p57
    %p64 = scmp.eq.s32.totalorder %s8, 1
    %p65 = por %p63, %p64
    %p66 = scmp.ne.s32.totalorder %s58, %s61
    %p67 = scmp.eq.s32.totalorder %s8, 0
    %p68 = por %p66, %p67
    %p69 = scmp.ne.s32.totalorder %s58, %s61
    %p70 = scmp.eq.s32.totalorder %s13, 1
    %p71 = por %p69, %p70
    %p72 = scmp.ne.s32.totalorder %s61, %s62
    %p73 = scmp.eq.s32.totalorder %s13, 0
    %p74 = por %p72, %p73
    %p75 = scmp.ne.s32.totalorder %s61, %s62
    %p76 = scmp.eq.s32.totalorder %s14, 1
    %p77 = por %p75, %p76
    %p79 = scmp.ne.s32.totalorder %s62, %s78
    %p80 = scmp.eq.s32.totalorder %s14, 0
    %p81 = por %p79, %p80
    %s82 = ssub.s32 %s15, %s27
    %p83 = scmp.eq.s32.totalorder %s82, 0
    %s85 = sadd.s32 %s84, 1
    %s86 = scalar_select %p83, %s84, %s85
    %p89 = pneg %p83
    %p90 = scmp.eq.s32.totalorder %s8, 1
    %p91 = por %p89, %p90
    %p92 = scmp.ne.s32.totalorder %s84, %s87
    %p93 = scmp.eq.s32.totalorder %s8, 0
    %p94 = por %p92, %p93
    %p95 = scmp.ne.s32.totalorder %s84, %s87
    %p96 = scmp.eq.s32.totalorder %s13, 1
    %p97 = por %p95, %p96
    %p98 = scmp.ne.s32.totalorder %s87, %s88
    %p99 = scmp.eq.s32.totalorder %s13, 0
    %p100 = por %p98, %p99
    %p101 = scmp.ne.s32.totalorder %s87, %s88
    %p102 = scmp.eq.s32.totalorder %s14, 1
    %p103 = por %p101, %p102
    %p105 = scmp.ne.s32.totalorder %s88, %s104
    %p106 = scmp.eq.s32.totalorder %s14, 0
    %p107 = por %p105, %p106
    %p108 = scmp.le.s32.totalorder 1, %s8
    %p109 = scmp.lt.s32.totalorder %s8, 3
    %p110 = pnand %p108, %p109
    %p111 = pneg %p110
    // Predicated region
    $region9: #{gcn_without_d_forward.3} parent=5 // pred_check
      _
    $region10: #{gcn_without_d_forward.3} parent=5 // pred_check_branch
      %113 = sbr.rel (%p110) target = $region12
    $region11: #{gcn_without_d_forward.3} parent=5 // pred_region
      %s114 = ssub.s32 %s8, 1
      // Predicated region
      $region13: #{gcn_without_d_forward.3} parent=11 // pred_check
        %p115 = pneg %p74
      $region14: #{gcn_without_d_forward.3} parent=11 // pred_check_branch
        %117 = sbr.rel (%p115) target = $region16
      $region15: #{gcn_without_d_forward.3} parent=11 // pred_region
        %s118 = smul.u32 16, %s18
        %p119 = scmp.lt.s32.totalorder %s118, 15
        %s120 = scalar_select %p119, %s118, 15
        %s121 = smul.addr %s120, 4
        %s122 = scalar_lea.vmem %s1, %s121
        %s123 = smul.u32 16, %s18
      $region16: #{gcn_without_d_forward.3} parent=11 // pred_fallthru
        _
    $region12: #{gcn_without_d_forward.3} parent=5 // pred_fallthru
      _
    %p124 = scmp.lt.s32.totalorder %s8, 2
    // Predicated region
    $region17: #{gcn_without_d_forward.3} parent=5 // pred_check
      %p125 = pneg %p124
    $region18: #{gcn_without_d_forward.3} parent=5 // pred_check_branch
      %127 = sbr.rel (%p125) target = $region20
    $region19: #{gcn_without_d_forward.3} parent=5 // pred_region
      // Predicated region
      $region21: #{gcn_without_d_forward.3} parent=19 // pred_check
        %p128 = pneg %p42
      $region22: #{gcn_without_d_forward.3} parent=19 // pred_check_branch
        %130 = sbr.rel (%p128) target = $region24
      $region23: #{gcn_without_d_forward.3} parent=19 // pred_region
        %s131 = smul.u32 16, %s15
        %p132 = scmp.lt.s32.totalorder %s131, 31
        %s133 = scalar_select %p132, %s131, 31
        %p134 = scmp.lt.s32.totalorder %s16, 0
        %s135 = scalar_select %p134, %s16, 0
        %s136 = sadd.s32 %s135, %s133
        %s137 = smul.addr %s136, 4
        %s138 = scalar_lea.vmem %s0, %s137
        %s139 = smul.u32 16, %s15
      $region24: #{gcn_without_d_forward.3} parent=19 // pred_fallthru
        _
    $region20: #{gcn_without_d_forward.3} parent=5 // pred_fallthru
      _
    %p140 = scmp.le.s32.totalorder 1, %s8
    %p141 = scmp.lt.s32.totalorder %s8, 3
    %p142 = pnand %p140, %p141
    %p143 = pneg %p142
    // Predicated region
    $region25: #{gcn_without_d_forward.3} parent=5 // pred_check
      _
    $region26: #{gcn_without_d_forward.3} parent=5 // pred_check_branch
      %145 = sbr.rel (%p142) target = $region28
    $region27: #{gcn_without_d_forward.3} parent=5 // pred_region
      %s146 = ssub.s32 %s8, 1
      %s147 = smul.u32 16, %s17
      %p148 = scmp.lt.s32.totalorder %s147, 31
      %s149 = scalar_select %p148, %s147, 31
      %p150 = scmp.lt.s32.totalorder %s18, 0
      %s151 = scalar_select %p150, %s18, 0
      %s152 = sadd.s32 %s151, %s149
      %s153 = smul.addr %s152, 4
      %s154 = scalar_lea.vmem %s0, %s153
      %p155 = pneg %p48
      %p156 = pneg %p45
      %s157 = smul.u32 16, %s18
      %p158 = scmp.lt.s32.totalorder %s157, 15
      %s159 = scalar_select %p158, %s157, 15
      %s160 = smul.addr %s159, 4
      %s161 = scalar_lea.vmem %s1, %s160
      %p162 = pneg %p74
      %p163 = pneg %p71
      %p164 = pneg %p100
      %p165 = pneg %p97
      %s166 = smul.u32 16, %s17
      %p167 = scmp.lt.s32.totalorder %s166, 31
      %s168 = scalar_select %p167, %s166, 31
      %s169 = smul.addr %s168, 4
      %s170 = scalar_lea.vmem %s2, %s169
      %s171 = smul.u32 16, %s17
      %p172 = scmp.lt.s32.totalorder %s171, 31
      %s173 = scalar_select %p172, %s171, 31
      %p174 = scmp.lt.s32.totalorder %s18, 0
      %s175 = scalar_select %p174, %s18, 0
      %s176 = sadd.s32 %s175, %s173
      %s177 = smul.addr %s176, 4
      %s178 = scalar_lea.vmem %s0, %s177
      %s179 = smul.u32 16, %s17
      %s180 = smul.u32 16, %s18
      %p181 = scmp.lt.s32.totalorder %s180, 15
      %s182 = scalar_select %p181, %s180, 15
      %s183 = smul.addr %s182, 4
      %s184 = scalar_lea.vmem %s1, %s183
      %s185 = smul.u32 16, %s18
      %s186 = smul.u32 16, %s17
      %p187 = scmp.lt.s32.totalorder %s186, 31
      %s188 = scalar_select %p187, %s186, 31
      %s189 = smul.addr %s188, 4
      %s190 = scalar_lea.vmem %s2, %s189
      %s191 = smul.u32 16, %s17
      %v193 = vld [vmem:[%s178] sm:$0xf]
      %v194 = vld [vmem:[%s178 + $0x4] sm:$0xf]
      %v195 = vld [vmem:[%s178 + $0x8] sm:$0xf]
      %v196 = vld [vmem:[%s178 + $0xc] sm:$0xf]
      %v197 = vld [vmem:[%s178 + $0x10] sm:$0xf]
      %v198 = vld [vmem:[%s178 + $0x14] sm:$0xf]
      %v199 = vld [vmem:[%s178 + $0x18] sm:$0xf]
      %v200 = vld [vmem:[%s178 + $0x1c] sm:$0xf]
      %v201 = vld [vmem:[%s178 + $0x20] sm:$0xf]
      %v202 = vld [vmem:[%s178 + $0x24] sm:$0xf]
      %v203 = vld [vmem:[%s178 + $0x28] sm:$0xf]
      %v204 = vld [vmem:[%s178 + $0x2c] sm:$0xf]
      %v205 = vld [vmem:[%s178 + $0x30] sm:$0xf]
      %v206 = vld [vmem:[%s178 + $0x34] sm:$0xf]
      %v207 = vld [vmem:[%s178 + $0x38] sm:$0xf]
      %v208 = vld [vmem:[%s178 + $0x3c] sm:$0xf]
      %v209 = vld [vmem:[%s184] sm:$0xf]
      %v210 = vld [vmem:[%s184 + $0x4] sm:$0xf]
      %v211 = vld [vmem:[%s184 + $0x8] sm:$0xf]
      %v212 = vld [vmem:[%s184 + $0xc] sm:$0xf]
      %v213 = vld [vmem:[%s184 + $0x10] sm:$0xf]
      %v214 = vld [vmem:[%s184 + $0x14] sm:$0xf]
      %v215 = vld [vmem:[%s184 + $0x18] sm:$0xf]
      %v216 = vld [vmem:[%s184 + $0x1c] sm:$0xf]
      %v217 = vld [vmem:[%s184 + $0x20] sm:$0xf]
      %v218 = vld [vmem:[%s184 + $0x24] sm:$0xf]
      %v219 = vld [vmem:[%s184 + $0x28] sm:$0xf]
      %v220 = vld [vmem:[%s184 + $0x2c] sm:$0xf]
      %v221 = vld [vmem:[%s184 + $0x30] sm:$0xf]
      %v222 = vld [vmem:[%s184 + $0x34] sm:$0xf]
      %v223 = vld [vmem:[%s184 + $0x38] sm:$0xf]
      %v224 = vld [vmem:[%s184 + $0x3c] sm:$0xf]
      %v241 = vunpack.c.l.b16 %v193
      %v242 = vunpack.c.l.b16 %v194
      %v243 = vunpack.c.l.b16 %v195
      %v244 = vunpack.c.l.b16 %v196
      %v245 = vunpack.c.l.b16 %v197
      %v246 = vunpack.c.l.b16 %v198
      %v247 = vunpack.c.l.b16 %v199
      %v248 = vunpack.c.l.b16 %v200
      %v249 = vunpack.c.l.b16 %v201
      %v250 = vunpack.c.l.b16 %v202
      %v251 = vunpack.c.l.b16 %v203
      %v252 = vunpack.c.l.b16 %v204
      %v253 = vunpack.c.l.b16 %v205
      %v254 = vunpack.c.l.b16 %v206
      %v255 = vunpack.c.l.b16 %v207
      %v256 = vunpack.c.l.b16 %v208
      %v257 = vpack.c.b16 %v242, %v241
      %v258 = vpack.c.b16 %v244, %v243
      %v259 = vpack.c.b16 %v246, %v245
      %v260 = vpack.c.b16 %v248, %v247
      %v261 = vpack.c.b16 %v250, %v249
      %v262 = vpack.c.b16 %v252, %v251
      %v263 = vpack.c.b16 %v254, %v253
      %v264 = vpack.c.b16 %v256, %v255
      %v289 = vunpack.c.l.b16 %v209
      %v290 = vunpack.c.l.b16 %v210
      %v291 = vunpack.c.l.b16 %v211
      %v292 = vunpack.c.l.b16 %v212
      %v293 = vunpack.c.l.b16 %v213
      %v294 = vunpack.c.l.b16 %v214
      %v295 = vunpack.c.l.b16 %v215
      %v296 = vunpack.c.l.b16 %v216
      %v297 = vunpack.c.l.b16 %v217
      %v298 = vunpack.c.l.b16 %v218
      %v299 = vunpack.c.l.b16 %v219
      %v300 = vunpack.c.l.b16 %v220
      %v301 = vunpack.c.l.b16 %v221
      %v302 = vunpack.c.l.b16 %v222
      %v303 = vunpack.c.l.b16 %v223
      %v304 = vunpack.c.l.b16 %v224
      %v305 = vpack.c.b16 %v290, %v289
      %v306 = vpack.c.b16 %v292, %v291
      %v307 = vpack.c.b16 %v294, %v293
      %v308 = vpack.c.b16 %v296, %v295
      %v309 = vpack.c.b16 %v298, %v297
      %v310 = vpack.c.b16 %v300, %v299
      %v311 = vpack.c.b16 %v302, %v301
      %v312 = vpack.c.b16 %v304, %v303
      %321 = vmatprep.subr.bf16.mxu0 0
      %322 = vmatpush1.bf16.msra.mxu0 %v305
      %323 = vmatprep.subr.bf16.mxu0 0
      %324 = vmatpush1.bf16.msra.mxu0 %v306
      %325 = vmatprep.subr.bf16.mxu0 0
      %326 = vmatpush1.bf16.msra.mxu0 %v307
      %327 = vmatprep.subr.bf16.mxu0 0
      %328 = vmatpush1.bf16.msra.mxu0 %v308
      %329 = vmatprep.subr.bf16.mxu0 0
      %330 = vmatpush1.bf16.msra.mxu0 %v309
      %331 = vmatprep.subr.bf16.mxu0 0
      %332 = vmatpush1.bf16.msra.mxu0 %v310
      %333 = vmatprep.subr.bf16.mxu0 0
      %334 = vmatpush1.bf16.msra.mxu0 %v311
      %335 = vmatprep.subr.bf16.mxu0 0
      %336 = vmatpush1.bf16.msra.mxu0 %v312
      %337 = vmatprep.subr.bf16.mxu0 0
      %338 = vmatpush1.bf16.msra.mxu0 0
      %339 = vmatprep.subr.bf16.mxu0 0
      %340 = vmatpush1.bf16.msra.mxu0 0
      %341 = vmatprep.subr.bf16.mxu0 0
      %342 = vmatpush1.bf16.msra.mxu0 0
      %343 = vmatprep.subr.bf16.mxu0 0
      %344 = vmatpush1.bf16.msra.mxu0 0
      %345 = vmatprep.subr.bf16.mxu0 0
      %346 = vmatpush1.bf16.msra.mxu0 0
      %347 = vmatprep.subr.bf16.mxu0 0
      %348 = vmatpush1.bf16.msra.mxu0 0
      %349 = vmatprep.subr.bf16.mxu0 0
      %350 = vmatpush1.bf16.msra.mxu0 0
      %351 = vmatprep.subr.bf16.mxu0 0
      %352 = vmatpush1.bf16.msra.mxu0 0
      %353 = vmatprep.mubr.bf16.mxu0 0
      %354 = vmatmul.mubr.bf16.gmra.mrb[0].mxu0 %v257
      %v355 = vpop.f32.mrb[0].mxu0
      %v356 = vadd.f32 0.0, %v355
      %v357 = vpop.f32.mrb[0].mxu0
      %v358 = vpop.f32.mrb[0].mxu0
      %v359 = vadd.f32 0.0, %v358
      %v360 = vpop.f32.mrb[0].mxu0
      %361 = vmatprep.mubr.bf16.mxu0 0
      %362 = vmatmul.mubr.bf16.gmra.mrb[0].mxu0 %v258
      %v363 = vpop.f32.mrb[0].mxu0
      %v364 = vadd.f32 0.0, %v363
      %v365 = vpop.f32.mrb[0].mxu0
      %v366 = vpop.f32.mrb[0].mxu0
      %v367 = vadd.f32 0.0, %v366
      %v368 = vpop.f32.mrb[0].mxu0
      %369 = vmatprep.mubr.bf16.mxu0 0
      %370 = vmatmul.mubr.bf16.gmra.mrb[0].mxu0 %v259
      %v371 = vpop.f32.mrb[0].mxu0
      %v372 = vadd.f32 0.0, %v371
      %v373 = vpop.f32.mrb[0].mxu0
      %v374 = vpop.f32.mrb[0].mxu0
      %v375 = vadd.f32 0.0, %v374
      %v376 = vpop.f32.mrb[0].mxu0
      %377 = vmatprep.mubr.bf16.mxu0 0
      %378 = vmatmul.mubr.bf16.gmra.mrb[0].mxu0 %v260
      %v379 = vpop.f32.mrb[0].mxu0
      %v380 = vadd.f32 0.0, %v379
      %v381 = vpop.f32.mrb[0].mxu0
      %v382 = vpop.f32.mrb[0].mxu0
      %v383 = vadd.f32 0.0, %v382
      %v384 = vpop.f32.mrb[0].mxu0
      %385 = vmatprep.mubr.bf16.mxu0 0
      %386 = vmatmul.mubr.bf16.gmra.mrb[0].mxu0 %v261
      %v387 = vpop.f32.mrb[0].mxu0
      %v388 = vadd.f32 0.0, %v387
      %v389 = vpop.f32.mrb[0].mxu0
      %v390 = vpop.f32.mrb[0].mxu0
      %v391 = vadd.f32 0.0, %v390
      %v392 = vpop.f32.mrb[0].mxu0
      %393 = vmatprep.mubr.bf16.mxu0 0
      %394 = vmatmul.mubr.bf16.gmra.mrb[0].mxu0 %v262
      %v395 = vpop.f32.mrb[0].mxu0
      %v396 = vadd.f32 0.0, %v395
      %v397 = vpop.f32.mrb[0].mxu0
      %v398 = vpop.f32.mrb[0].mxu0
      %v399 = vadd.f32 0.0, %v398
      %v400 = vpop.f32.mrb[0].mxu0
      %401 = vmatprep.mubr.bf16.mxu0 0
      %402 = vmatmul.mubr.bf16.gmra.mrb[0].mxu0 %v263
      %v403 = vpop.f32.mrb[0].mxu0
      %v404 = vadd.f32 0.0, %v403
      %v405 = vpop.f32.mrb[0].mxu0
      %v406 = vpop.f32.mrb[0].mxu0
      %v407 = vadd.f32 0.0, %v406
      %v408 = vpop.f32.mrb[0].mxu0
      %409 = vmatprep.mubr.bf16.mxu0 0
      %410 = vmatmul.mubr.bf16.gmra.mrb[0].mxu0 %v264
      %v411 = vpop.f32.mrb[0].mxu0
      %v412 = vadd.f32 0.0, %v411
      %v413 = vpop.f32.mrb[0].mxu0
      %v414 = vpop.f32.mrb[0].mxu0
      %v415 = vadd.f32 0.0, %v414
      %v416 = vpop.f32.mrb[0].mxu0
      %417 = vdwg.mxu0
      %p418 = scmp.eq.s32.totalorder %s18, 0
      // Predicated region
      $region29: #{gcn_without_d_forward.3} parent=27 // pred_check
        %p419 = pneg %p418
      $region30: #{gcn_without_d_forward.3} parent=27 // pred_check_branch
        %421 = sbr.rel (%p419) target = $region32
      $region31: #{gcn_without_d_forward.3} parent=27 // pred_region
        %422 = vst [vmem:[#allocation2] sm:$0xff] %v356
        %423 = vst [vmem:[#allocation2 + $0x8] sm:$0xff] %v359
        %424 = vst [vmem:[#allocation2 + $0x10] sm:$0xff] %v364
        %425 = vst [vmem:[#allocation2 + $0x18] sm:$0xff] %v367
        %426 = vst [vmem:[#allocation2 + $0x20] sm:$0xff] %v372
        %427 = vst [vmem:[#allocation2 + $0x28] sm:$0xff] %v375
        %428 = vst [vmem:[#allocation2 + $0x30] sm:$0xff] %v380
        %429 = vst [vmem:[#allocation2 + $0x38] sm:$0xff] %v383
        %430 = vst [vmem:[#allocation2 + $0x40] sm:$0xff] %v388
        %431 = vst [vmem:[#allocation2 + $0x48] sm:$0xff] %v391
        %432 = vst [vmem:[#allocation2 + $0x50] sm:$0xff] %v396
        %433 = vst [vmem:[#allocation2 + $0x58] sm:$0xff] %v399
        %434 = vst [vmem:[#allocation2 + $0x60] sm:$0xff] %v404
        %435 = vst [vmem:[#allocation2 + $0x68] sm:$0xff] %v407
        %436 = vst [vmem:[#allocation2 + $0x70] sm:$0xff] %v412
        %437 = vst [vmem:[#allocation2 + $0x78] sm:$0xff] %v415
      $region32: #{gcn_without_d_forward.3} parent=27 // pred_fallthru
        _
      %p438 = scmp.ne.s32.totalorder %s18, 0
      // Predicated region
      $region33: #{gcn_without_d_forward.3} parent=27 // pred_check
        %p439 = pneg %p438
      $region34: #{gcn_without_d_forward.3} parent=27 // pred_check_branch
        %441 = sbr.rel (%p439) target = $region36
      $region35: #{gcn_without_d_forward.3} parent=27 // pred_region
        %v442 = vld [vmem:[#allocation2] sm:$0xff]
        %v443 = vld [vmem:[#allocation2 + $0x8] sm:$0xff]
        %v444 = vld [vmem:[#allocation2 + $0x10] sm:$0xff]
        %v445 = vld [vmem:[#allocation2 + $0x18] sm:$0xff]
        %v446 = vld [vmem:[#allocation2 + $0x20] sm:$0xff]
        %v447 = vld [vmem:[#allocation2 + $0x28] sm:$0xff]
        %v448 = vld [vmem:[#allocation2 + $0x30] sm:$0xff]
        %v449 = vld [vmem:[#allocation2 + $0x38] sm:$0xff]
        %v450 = vld [vmem:[#allocation2 + $0x40] sm:$0xff]
        %v451 = vld [vmem:[#allocation2 + $0x48] sm:$0xff]
        %v452 = vld [vmem:[#allocation2 + $0x50] sm:$0xff]
        %v453 = vld [vmem:[#allocation2 + $0x58] sm:$0xff]
        %v454 = vld [vmem:[#allocation2 + $0x60] sm:$0xff]
        %v455 = vld [vmem:[#allocation2 + $0x68] sm:$0xff]
        %v456 = vld [vmem:[#allocation2 + $0x70] sm:$0xff]
        %v457 = vld [vmem:[#allocation2 + $0x78] sm:$0xff]
        %v458 = vadd.f32 %v442, %v356
        %v459 = vadd.f32 %v443, %v359
        %v460 = vadd.f32 %v444, %v364
        %v461 = vadd.f32 %v445, %v367
        %v462 = vadd.f32 %v446, %v372
        %v463 = vadd.f32 %v447, %v375
        %v464 = vadd.f32 %v448, %v380
        %v465 = vadd.f32 %v449, %v383
        %v466 = vadd.f32 %v450, %v388
        %v467 = vadd.f32 %v451, %v391
        %v468 = vadd.f32 %v452, %v396
        %v469 = vadd.f32 %v453, %v399
        %v470 = vadd.f32 %v454, %v404
        %v471 = vadd.f32 %v455, %v407
        %v472 = vadd.f32 %v456, %v412
        %v473 = vadd.f32 %v457, %v415
        %474 = vst [vmem:[#allocation2] sm:$0xff] %v458
        %475 = vst [vmem:[#allocation2 + $0x8] sm:$0xff] %v459
        %476 = vst [vmem:[#allocation2 + $0x10] sm:$0xff] %v460
        %477 = vst [vmem:[#allocation2 + $0x18] sm:$0xff] %v461
        %478 = vst [vmem:[#allocation2 + $0x20] sm:$0xff] %v462
        %479 = vst [vmem:[#allocation2 + $0x28] sm:$0xff] %v463
        %480 = vst [vmem:[#allocation2 + $0x30] sm:$0xff] %v464
        %481 = vst [vmem:[#allocation2 + $0x38] sm:$0xff] %v465
        %482 = vst [vmem:[#allocation2 + $0x40] sm:$0xff] %v466
        %483 = vst [vmem:[#allocation2 + $0x48] sm:$0xff] %v467
        %484 = vst [vmem:[#allocation2 + $0x50] sm:$0xff] %v468
        %485 = vst [vmem:[#allocation2 + $0x58] sm:$0xff] %v469
        %486 = vst [vmem:[#allocation2 + $0x60] sm:$0xff] %v470
        %487 = vst [vmem:[#allocation2 + $0x68] sm:$0xff] %v471
        %488 = vst [vmem:[#allocation2 + $0x70] sm:$0xff] %v472
        %489 = vst [vmem:[#allocation2 + $0x78] sm:$0xff] %v473
      $region36: #{gcn_without_d_forward.3} parent=27 // pred_fallthru
        _
      // Predicated region
      $region37: #{gcn_without_d_forward.3} parent=27 // pred_check
        %p490 = pneg %p418
      $region38: #{gcn_without_d_forward.3} parent=27 // pred_check_branch
        %492 = sbr.rel (%p490) target = $region40
      $region39: #{gcn_without_d_forward.3} parent=27 // pred_region
        %v493 = vld [vmem:[#allocation2] sm:$0xff]
        %v494 = vld [vmem:[#allocation2 + $0x8] sm:$0xff]
        %v495 = vld [vmem:[#allocation2 + $0x10] sm:$0xff]
        %v496 = vld [vmem:[#allocation2 + $0x18] sm:$0xff]
        %v497 = vld [vmem:[#allocation2 + $0x20] sm:$0xff]
        %v498 = vld [vmem:[#allocation2 + $0x28] sm:$0xff]
        %v499 = vld [vmem:[#allocation2 + $0x30] sm:$0xff]
        %v500 = vld [vmem:[#allocation2 + $0x38] sm:$0xff]
        %v501 = vld [vmem:[#allocation2 + $0x40] sm:$0xff]
        %v502 = vld [vmem:[#allocation2 + $0x48] sm:$0xff]
        %v503 = vld [vmem:[#allocation2 + $0x50] sm:$0xff]
        %v504 = vld [vmem:[#allocation2 + $0x58] sm:$0xff]
        %v505 = vld [vmem:[#allocation2 + $0x60] sm:$0xff]
        %v506 = vld [vmem:[#allocation2 + $0x68] sm:$0xff]
        %v507 = vld [vmem:[#allocation2 + $0x70] sm:$0xff]
        %v508 = vld [vmem:[#allocation2 + $0x78] sm:$0xff]
        %v509 = vpack.c.bf16 %v494, %v493
        %v510 = vpack.c.bf16 %v496, %v495
        %v511 = vpack.c.bf16 %v498, %v497
        %v512 = vpack.c.bf16 %v500, %v499
        %v513 = vpack.c.bf16 %v502, %v501
        %v514 = vpack.c.bf16 %v504, %v503
        %v515 = vpack.c.bf16 %v506, %v505
        %v516 = vpack.c.bf16 %v508, %v507
        %v525 = vunpack.c.l.b16 %v509
        %v526 = vunpack.c.h.b16 %v509
        %v527 = vunpack.c.l.b16 %v510
        %v528 = vunpack.c.h.b16 %v510
        %v529 = vunpack.c.l.b16 %v511
        %v530 = vunpack.c.h.b16 %v511
        %v531 = vunpack.c.l.b16 %v512
        %v532 = vunpack.c.h.b16 %v512
        %v533 = vunpack.c.l.b16 %v513
        %v534 = vunpack.c.h.b16 %v513
        %v535 = vunpack.c.l.b16 %v514
        %v536 = vunpack.c.h.b16 %v514
        %v537 = vunpack.c.l.b16 %v515
        %v538 = vunpack.c.h.b16 %v515
        %v539 = vunpack.c.l.b16 %v516
        %v540 = vunpack.c.h.b16 %v516
        %v541 = vpack.c.b16 %v525, %v525
        %v542 = vpack.c.b16 %v526, %v526
        %v543 = vpack.c.b16 %v527, %v527
        %v544 = vpack.c.b16 %v528, %v528
        %v545 = vpack.c.b16 %v529, %v529
        %v546 = vpack.c.b16 %v530, %v530
        %v547 = vpack.c.b16 %v531, %v531
        %v548 = vpack.c.b16 %v532, %v532
        %v549 = vpack.c.b16 %v533, %v533
        %v550 = vpack.c.b16 %v534, %v534
        %v551 = vpack.c.b16 %v535, %v535
        %v552 = vpack.c.b16 %v536, %v536
        %v553 = vpack.c.b16 %v537, %v537
        %v554 = vpack.c.b16 %v538, %v538
        %v555 = vpack.c.b16 %v539, %v539
        %v556 = vpack.c.b16 %v540, %v540
        %573 = vst [vmem:[%s190] sm:$0xf] %v541
        %574 = vst [vmem:[%s190 + $0x4] sm:$0xf] %v542
        %575 = vst [vmem:[%s190 + $0x8] sm:$0xf] %v543
        %576 = vst [vmem:[%s190 + $0xc] sm:$0xf] %v544
        %577 = vst [vmem:[%s190 + $0x10] sm:$0xf] %v545
        %578 = vst [vmem:[%s190 + $0x14] sm:$0xf] %v546
        %579 = vst [vmem:[%s190 + $0x18] sm:$0xf] %v547
        %580 = vst [vmem:[%s190 + $0x1c] sm:$0xf] %v548
        %581 = vst [vmem:[%s190 + $0x20] sm:$0xf] %v549
        %582 = vst [vmem:[%s190 + $0x24] sm:$0xf] %v550
        %583 = vst [vmem:[%s190 + $0x28] sm:$0xf] %v551
        %584 = vst [vmem:[%s190 + $0x2c] sm:$0xf] %v552
        %585 = vst [vmem:[%s190 + $0x30] sm:$0xf] %v553
        %586 = vst [vmem:[%s190 + $0x34] sm:$0xf] %v554
        %587 = vst [vmem:[%s190 + $0x38] sm:$0xf] %v555
        %588 = vst [vmem:[%s190 + $0x3c] sm:$0xf] %v556
      $region40: #{gcn_without_d_forward.3} parent=27 // pred_fallthru
        _
      %s589 = smul.u32 16, %s17
      %p590 = scmp.lt.s32.totalorder %s589, 31
      %s591 = scalar_select %p590, %s589, 31
      %s592 = smul.addr %s591, 4
      %s593 = scalar_lea.vmem %s2, %s592
      // Predicated region
      $region41: #{gcn_without_d_forward.3} parent=27 // pred_check
        %p594 = pneg %p97
      $region42: #{gcn_without_d_forward.3} parent=27 // pred_check_branch
        %596 = sbr.rel (%p594) target = $region44
      $region43: #{gcn_without_d_forward.3} parent=27 // pred_region
        %s597 = smul.u32 16, %s17
      $region44: #{gcn_without_d_forward.3} parent=27 // pred_fallthru
        _
    $region28: #{gcn_without_d_forward.3} parent=5 // pred_fallthru
      _
    %p598 = scmp.le.s32.totalorder 2, %s8
    // Predicated region
    $region45: #{gcn_without_d_forward.3} parent=5 // pred_check
      %p599 = pneg %p598
    $region46: #{gcn_without_d_forward.3} parent=5 // pred_check_branch
      %601 = sbr.rel (%p599) target = $region48
    $region47: #{gcn_without_d_forward.3} parent=5 // pred_region
      %s602 = ssub.s32 %s8, 2
      // Predicated region
      $region49: #{gcn_without_d_forward.3} parent=47 // pred_check
        %p603 = pneg %p103
      $region50: #{gcn_without_d_forward.3} parent=47 // pred_check_branch
        %605 = sbr.rel (%p603) target = $region52
      $region51: #{gcn_without_d_forward.3} parent=47 // pred_region
        %s606 = smul.u32 16, %s19
        %p607 = scmp.lt.s32.totalorder %s606, 31
        %s608 = scalar_select %p607, %s606, 31
        %s609 = smul.addr %s608, 4
        %s610 = scalar_lea.vmem %s2, %s609
      $region52: #{gcn_without_d_forward.3} parent=47 // pred_fallthru
        _
    $region48: #{gcn_without_d_forward.3} parent=5 // pred_fallthru
      _
  $region6: #{gcn_without_d_forward.3} parent=0 // loop_footer
    %s12 = sadd.s32 1, %s8
  $region7: #{gcn_without_d_forward.3} parent=0 // loop_footer_branch
    %7 = sbr.rel target = $region3
  $region8: #{gcn_without_d_forward.3} parent=0 // loop_exit
    _

// kernel: gcn_without_d_forward.4
$region0: #{gcn_without_d_forward.4}
  #allocation0 [shape = 'u32[]', space=smem, size = 0x4, offset = 0x4, fixed_abs, tag = 'smem constant byte address 0x4 - core index']
  #allocation1 [shape = 'u32[144,128]{1,0:T(1,128)}', space=vmem, size = 0x12000, scoped, tag = 'internal scratch']
  #allocation2 [shape = 'f32[128,128]{1,0:T(8,128)}', space=vmem, size = 0x10000, scoped, tag = 'scratch operand']
  %s0 = inlined_call_operand.vmem [shape: bf16[256,256], index: 0, kind: input, shape index: {}]
  %s1 = inlined_call_operand.vmem [shape: bf16[256,128], index: 1, kind: input, shape index: {}]
  %s2 = inlined_call_operand.vmem [shape: bf16[128,128], index: 2, kind: input, shape index: {}]
  %s3 = inlined_call_operand.vmem [shape: bf16[256,128], index: 3, kind: output, shape index: {}]
  %s4 = sld [smem:[#allocation0]]
  $region57: #{gcn_without_d_forward.4} parent=0
    _
  %s6 = ssub.s32 1, %s4
  %s7 = scalar_select 0, %s6, %s4
  loop: start=0, step=1, limit=4
  $region2: #{gcn_without_d_forward.4} parent=0 // loop_pre_header
    _
  $region3: #{gcn_without_d_forward.4} parent=0 // loop_header
    %s9 = sphi 0, %s13
    %p10 = scmp.ge.s32.totalorder %s9, 4
    %s16 = sphi 0, %s28
    %s17 = sphi 0, %s24
    %s18 = sphi 0, %s16
    %s19 = sphi 0, %s17
    %s20 = sphi 0, %s18
    %s21 = sphi 0, %s19
    %s33 = sphi 0, %s35
    %s36 = sphi 0, %s33
    %s37 = sphi 0, %s36
    %s53 = sphi 0, %s37
    %s59 = sphi 0, %s61
    %s62 = sphi 0, %s59
    %s63 = sphi 0, %s62
    %s79 = sphi 0, %s63
    %s83 = sphi 0, %s83
    %s85 = sphi 0, %s83
    %s86 = sphi 0, %s85
    %s100 = sphi 0, %s86
    %s106 = sphi 0, %s108
    %s109 = sphi 0, %s106
    %s110 = sphi 0, %s109
    %s126 = sphi 0, %s110
  $region4: #{gcn_without_d_forward.4} parent=0 // loop_header_branch
    %12 = sbr.rel (%p10) target = $region8
  $region5: #{gcn_without_d_forward.4} parent=0 // loop_body
    %s14 = ssub.s32 %s9, 1
    %s15 = ssub.s32 %s9, 2
    %s22 = sadd.s32 1, %s17
    %p23 = scmp.ge.s32.totalorder %s22, 1
    %s24 = scalar_select %p23, 0, %s22
    %s25 = sadd.s32 1, %s16
    %s26 = scalar_select %p23, %s25, %s16
    %p27 = scmp.ge.s32.totalorder %s26, 2
    %s28 = scalar_select %p27, 0, %s26
    %s29 = ssub.s32 %s16, %s28
    %s30 = ssub.s32 %s17, %s24
    %s31 = sor.u32 %s29, %s30
    %p32 = scmp.eq.s32.totalorder %s31, 0
    %s34 = sadd.s32 %s33, 1
    %s35 = scalar_select %p32, %s33, %s34
    %p38 = pneg %p32
    %p39 = scmp.eq.s32.totalorder %s9, 1
    %p40 = por %p38, %p39
    %p41 = scmp.ne.s32.totalorder %s33, %s36
    %p42 = scmp.eq.s32.totalorder %s9, 0
    %p43 = por %p41, %p42
    %p44 = scmp.ne.s32.totalorder %s33, %s36
    %p45 = scmp.eq.s32.totalorder %s14, 1
    %p46 = por %p44, %p45
    %p47 = scmp.ne.s32.totalorder %s36, %s37
    %p48 = scmp.eq.s32.totalorder %s14, 0
    %p49 = por %p47, %p48
    %p50 = scmp.ne.s32.totalorder %s36, %s37
    %p51 = scmp.eq.s32.totalorder %s15, 1
    %p52 = por %p50, %p51
    %p54 = scmp.ne.s32.totalorder %s37, %s53
    %p55 = scmp.eq.s32.totalorder %s15, 0
    %p56 = por %p54, %p55
    %s57 = ssub.s32 %s17, %s24
    %p58 = scmp.eq.s32.totalorder %s57, 0
    %s60 = sadd.s32 %s59, 1
    %s61 = scalar_select %p58, %s59, %s60
    %p64 = pneg %p58
    %p65 = scmp.eq.s32.totalorder %s9, 1
    %p66 = por %p64, %p65
    %p67 = scmp.ne.s32.totalorder %s59, %s62
    %p68 = scmp.eq.s32.totalorder %s9, 0
    %p69 = por %p67, %p68
    %p70 = scmp.ne.s32.totalorder %s59, %s62
    %p71 = scmp.eq.s32.totalorder %s14, 1
    %p72 = por %p70, %p71
    %p73 = scmp.ne.s32.totalorder %s62, %s63
    %p74 = scmp.eq.s32.totalorder %s14, 0
    %p75 = por %p73, %p74
    %p76 = scmp.ne.s32.totalorder %s62, %s63
    %p77 = scmp.eq.s32.totalorder %s15, 1
    %p78 = por %p76, %p77
    %p80 = scmp.ne.s32.totalorder %s63, %s79
    %p81 = scmp.eq.s32.totalorder %s15, 0
    %p82 = por %p80, %p81
    %s84 = sadd.s32 %s83, 1
    %p87 = scmp.eq.s32.totalorder %s9, 1
    %p88 = scmp.ne.s32.totalorder %s83, %s85
    %p89 = scmp.eq.s32.totalorder %s9, 0
    %p90 = por %p88, %p89
    %p91 = scmp.ne.s32.totalorder %s83, %s85
    %p92 = scmp.eq.s32.totalorder %s14, 1
    %p93 = por %p91, %p92
    %p94 = scmp.ne.s32.totalorder %s85, %s86
    %p95 = scmp.eq.s32.totalorder %s14, 0
    %p96 = por %p94, %p95
    %p97 = scmp.ne.s32.totalorder %s85, %s86
    %p98 = scmp.eq.s32.totalorder %s15, 1
    %p99 = por %p97, %p98
    %p101 = scmp.ne.s32.totalorder %s86, %s100
    %p102 = scmp.eq.s32.totalorder %s15, 0
    %p103 = por %p101, %p102
    %s104 = ssub.s32 %s16, %s28
    %p105 = scmp.eq.s32.totalorder %s104, 0
    %s107 = sadd.s32 %s106, 1
    %s108 = scalar_select %p105, %s106, %s107
    %p111 = pneg %p105
    %p112 = scmp.eq.s32.totalorder %s9, 1
    %p113 = por %p111, %p112
    %p114 = scmp.ne.s32.totalorder %s106, %s109
    %p115 = scmp.eq.s32.totalorder %s9, 0
    %p116 = por %p114, %p115
    %p117 = scmp.ne.s32.totalorder %s106, %s109
    %p118 = scmp.eq.s32.totalorder %s14, 1
    %p119 = por %p117, %p118
    %p120 = scmp.ne.s32.totalorder %s109, %s110
    %p121 = scmp.eq.s32.totalorder %s14, 0
    %p122 = por %p120, %p121
    %p123 = scmp.ne.s32.totalorder %s109, %s110
    %p124 = scmp.eq.s32.totalorder %s15, 1
    %p125 = por %p123, %p124
    %p127 = scmp.ne.s32.totalorder %s110, %s126
    %p128 = scmp.eq.s32.totalorder %s15, 0
    %p129 = por %p127, %p128
    %p130 = scmp.le.s32.totalorder 1, %s9
    %p131 = scmp.lt.s32.totalorder %s9, 3
    %p132 = pnand %p130, %p131
    %p133 = pneg %p132
    // Predicated region
    $region9: #{gcn_without_d_forward.4} parent=5 // pred_check
      _
    $region10: #{gcn_without_d_forward.4} parent=5 // pred_check_branch
      %135 = sbr.rel (%p132) target = $region12
    $region11: #{gcn_without_d_forward.4} parent=5 // pred_region
      %s136 = ssub.s32 %s9, 1
      // Predicated region
      $region13: #{gcn_without_d_forward.4} parent=11 // pred_check
        %p137 = pneg %p75
      $region14: #{gcn_without_d_forward.4} parent=11 // pred_check_branch
        %139 = sbr.rel (%p137) target = $region16
      $region15: #{gcn_without_d_forward.4} parent=11 // pred_region
        %s140 = smul.u32 32, %s19
        %p141 = scmp.lt.s32.totalorder %s140, 31
        %s142 = scalar_select %p141, %s140, 31
        %s143 = smul.addr %s142, 4
        %s144 = scalar_lea.vmem %s1, %s143
        %s145 = smul.u32 32, %s19
      $region16: #{gcn_without_d_forward.4} parent=11 // pred_fallthru
        _
      // Predicated region
      $region17: #{gcn_without_d_forward.4} parent=11 // pred_check
        %p146 = pneg %p96
      $region18: #{gcn_without_d_forward.4} parent=11 // pred_check_branch
        %148 = sbr.rel (%p146) target = $region20
      $region19: #{gcn_without_d_forward.4} parent=11 // pred_region
        _
      $region20: #{gcn_without_d_forward.4} parent=11 // pred_fallthru
        _
    $region12: #{gcn_without_d_forward.4} parent=5 // pred_fallthru
      _
    %p149 = scmp.lt.s32.totalorder %s9, 2
    // Predicated region
    $region21: #{gcn_without_d_forward.4} parent=5 // pred_check
      %p150 = pneg %p149
    $region22: #{gcn_without_d_forward.4} parent=5 // pred_check_branch
      %152 = sbr.rel (%p150) target = $region24
    $region23: #{gcn_without_d_forward.4} parent=5 // pred_region
      // Predicated region
      $region25: #{gcn_without_d_forward.4} parent=23 // pred_check
        %p153 = pneg %p43
      $region26: #{gcn_without_d_forward.4} parent=23 // pred_check_branch
        %155 = sbr.rel (%p153) target = $region28
      $region27: #{gcn_without_d_forward.4} parent=23 // pred_region
        %s156 = smul.u32 16, %s16
        %s157 = smul.u32 2, %s17
        %p158 = scmp.lt.s32.totalorder %s156, 31
        %s159 = scalar_select %p158, %s156, 31
        %p160 = scmp.lt.s32.totalorder %s157, 1
        %s161 = scalar_select %p160, %s157, 1
        %s162 = smul.addr %s159, 2
        %s163 = sadd.s32 %s161, %s162
        %s164 = smul.addr %s163, 4
        %s165 = scalar_lea.vmem %s0, %s164
        %s166 = smul.u32 16, %s16
        %s167 = smul.u32 2, %s17
      $region28: #{gcn_without_d_forward.4} parent=23 // pred_fallthru
        _
    $region24: #{gcn_without_d_forward.4} parent=5 // pred_fallthru
      _
    %p168 = scmp.le.s32.totalorder 1, %s9
    %p169 = scmp.lt.s32.totalorder %s9, 3
    %p170 = pnand %p168, %p169
    %p171 = pneg %p170
    // Predicated region
    $region29: #{gcn_without_d_forward.4} parent=5 // pred_check
      _
    $region30: #{gcn_without_d_forward.4} parent=5 // pred_check_branch
      %173 = sbr.rel (%p170) target = $region32
    $region31: #{gcn_without_d_forward.4} parent=5 // pred_region
      %s174 = ssub.s32 %s9, 1
      %s175 = smul.u32 16, %s18
      %s176 = smul.u32 2, %s19
      %p177 = scmp.lt.s32.totalorder %s175, 31
      %s178 = scalar_select %p177, %s175, 31
      %p179 = scmp.lt.s32.totalorder %s176, 1
      %s180 = scalar_select %p179, %s176, 1
      %s181 = smul.addr %s178, 2
      %s182 = sadd.s32 %s180, %s181
      %s183 = smul.addr %s182, 4
      %s184 = scalar_lea.vmem %s0, %s183
      %p185 = pneg %p49
      %p186 = pneg %p46
      %s187 = smul.u32 32, %s19
      %p188 = scmp.lt.s32.totalorder %s187, 31
      %s189 = scalar_select %p188, %s187, 31
      %s190 = smul.addr %s189, 4
      %s191 = scalar_lea.vmem %s1, %s190
      %p192 = pneg %p75
      %p193 = pneg %p72
      %p194 = pneg %p96
      %p195 = pneg %p93
      %p196 = pneg %p122
      %p197 = pneg %p119
      %s198 = smul.u32 16, %s18
      %p199 = scmp.lt.s32.totalorder %s198, 31
      %s200 = scalar_select %p199, %s198, 31
      %s201 = smul.addr %s200, 4
      %s202 = scalar_lea.vmem %s3, %s201
      %s203 = smul.u32 16, %s18
      %s204 = smul.u32 2, %s19
      %p205 = scmp.lt.s32.totalorder %s203, 31
      %s206 = scalar_select %p205, %s203, 31
      %p207 = scmp.lt.s32.totalorder %s204, 1
      %s208 = scalar_select %p207, %s204, 1
      %s209 = smul.addr %s206, 2
      %s210 = sadd.s32 %s208, %s209
      %s211 = smul.addr %s210, 4
      %s212 = scalar_lea.vmem %s0, %s211
      %s213 = smul.u32 16, %s18
      %s214 = smul.u32 2, %s19
      %s215 = smul.u32 32, %s19
      %p216 = scmp.lt.s32.totalorder %s215, 31
      %s217 = scalar_select %p216, %s215, 31
      %s218 = smul.addr %s217, 4
      %s219 = scalar_lea.vmem %s1, %s218
      %s220 = smul.u32 32, %s19
      %s221 = smul.u32 16, %s18
      %p222 = scmp.lt.s32.totalorder %s221, 31
      %s223 = scalar_select %p222, %s221, 31
      %s224 = smul.addr %s223, 4
      %s225 = scalar_lea.vmem %s3, %s224
      %s226 = smul.u32 16, %s18
      %v228 = vld [vmem:[%s212] sm:$0xff]
      %v229 = vld [vmem:[%s212 + $0x8] sm:$0xff]
      %v230 = vld [vmem:[%s212 + $0x10] sm:$0xff]
      %v231 = vld [vmem:[%s212 + $0x18] sm:$0xff]
      %v232 = vld [vmem:[%s212 + $0x20] sm:$0xff]
      %v233 = vld [vmem:[%s212 + $0x28] sm:$0xff]
      %v234 = vld [vmem:[%s212 + $0x30] sm:$0xff]
      %v235 = vld [vmem:[%s212 + $0x38] sm:$0xff]
      %v236 = vld [vmem:[%s212 + $0x40] sm:$0xff]
      %v237 = vld [vmem:[%s212 + $0x48] sm:$0xff]
      %v238 = vld [vmem:[%s212 + $0x50] sm:$0xff]
      %v239 = vld [vmem:[%s212 + $0x58] sm:$0xff]
      %v240 = vld [vmem:[%s212 + $0x60] sm:$0xff]
      %v241 = vld [vmem:[%s212 + $0x68] sm:$0xff]
      %v242 = vld [vmem:[%s212 + $0x70] sm:$0xff]
      %v243 = vld [vmem:[%s212 + $0x78] sm:$0xff]
      %v244 = vld [vmem:[%s219] sm:$0xf]
      %v245 = vld [vmem:[%s219 + $0x4] sm:$0xf]
      %v246 = vld [vmem:[%s219 + $0x8] sm:$0xf]
      %v247 = vld [vmem:[%s219 + $0xc] sm:$0xf]
      %v248 = vld [vmem:[%s219 + $0x10] sm:$0xf]
      %v249 = vld [vmem:[%s219 + $0x14] sm:$0xf]
      %v250 = vld [vmem:[%s219 + $0x18] sm:$0xf]
      %v251 = vld [vmem:[%s219 + $0x1c] sm:$0xf]
      %v252 = vld [vmem:[%s219 + $0x20] sm:$0xf]
      %v253 = vld [vmem:[%s219 + $0x24] sm:$0xf]
      %v254 = vld [vmem:[%s219 + $0x28] sm:$0xf]
      %v255 = vld [vmem:[%s219 + $0x2c] sm:$0xf]
      %v256 = vld [vmem:[%s219 + $0x30] sm:$0xf]
      %v257 = vld [vmem:[%s219 + $0x34] sm:$0xf]
      %v258 = vld [vmem:[%s219 + $0x38] sm:$0xf]
      %v259 = vld [vmem:[%s219 + $0x3c] sm:$0xf]
      %v260 = vld [vmem:[%s219 + $0x40] sm:$0xf]
      %v261 = vld [vmem:[%s219 + $0x44] sm:$0xf]
      %v262 = vld [vmem:[%s219 + $0x48] sm:$0xf]
      %v263 = vld [vmem:[%s219 + $0x4c] sm:$0xf]
      %v264 = vld [vmem:[%s219 + $0x50] sm:$0xf]
      %v265 = vld [vmem:[%s219 + $0x54] sm:$0xf]
      %v266 = vld [vmem:[%s219 + $0x58] sm:$0xf]
      %v267 = vld [vmem:[%s219 + $0x5c] sm:$0xf]
      %v268 = vld [vmem:[%s219 + $0x60] sm:$0xf]
      %v269 = vld [vmem:[%s219 + $0x64] sm:$0xf]
      %v270 = vld [vmem:[%s219 + $0x68] sm:$0xf]
      %v271 = vld [vmem:[%s219 + $0x6c] sm:$0xf]
      %v272 = vld [vmem:[%s219 + $0x70] sm:$0xf]
      %v273 = vld [vmem:[%s219 + $0x74] sm:$0xf]
      %v274 = vld [vmem:[%s219 + $0x78] sm:$0xf]
      %v275 = vld [vmem:[%s219 + $0x7c] sm:$0xf]
      %v292 = vunpack.c.l.b16 %v228
      %v293 = vunpack.c.h.b16 %v228
      %v294 = vunpack.c.l.b16 %v229
      %v295 = vunpack.c.h.b16 %v229
      %v296 = vunpack.c.l.b16 %v230
      %v297 = vunpack.c.h.b16 %v230
      %v298 = vunpack.c.l.b16 %v231
      %v299 = vunpack.c.h.b16 %v231
      %v300 = vunpack.c.l.b16 %v232
      %v301 = vunpack.c.h.b16 %v232
      %v302 = vunpack.c.l.b16 %v233
      %v303 = vunpack.c.h.b16 %v233
      %v304 = vunpack.c.l.b16 %v234
      %v305 = vunpack.c.h.b16 %v234
      %v306 = vunpack.c.l.b16 %v235
      %v307 = vunpack.c.h.b16 %v235
      %v308 = vunpack.c.l.b16 %v236
      %v309 = vunpack.c.h.b16 %v236
      %v310 = vunpack.c.l.b16 %v237
      %v311 = vunpack.c.h.b16 %v237
      %v312 = vunpack.c.l.b16 %v238
      %v313 = vunpack.c.h.b16 %v238
      %v314 = vunpack.c.l.b16 %v239
      %v315 = vunpack.c.h.b16 %v239
      %v316 = vunpack.c.l.b16 %v240
      %v317 = vunpack.c.h.b16 %v240
      %v318 = vunpack.c.l.b16 %v241
      %v319 = vunpack.c.h.b16 %v241
      %v320 = vunpack.c.l.b16 %v242
      %v321 = vunpack.c.h.b16 %v242
      %v322 = vunpack.c.l.b16 %v243
      %v323 = vunpack.c.h.b16 %v243
      %v324 = vpack.c.b16 %v294, %v292
      %v325 = vpack.c.b16 %v295, %v293
      %v326 = vpack.c.b16 %v298, %v296
      %v327 = vpack.c.b16 %v299, %v297
      %v328 = vpack.c.b16 %v302, %v300
      %v329 = vpack.c.b16 %v303, %v301
      %v330 = vpack.c.b16 %v306, %v304
      %v331 = vpack.c.b16 %v307, %v305
      %v332 = vpack.c.b16 %v310, %v308
      %v333 = vpack.c.b16 %v311, %v309
      %v334 = vpack.c.b16 %v314, %v312
      %v335 = vpack.c.b16 %v315, %v313
      %v336 = vpack.c.b16 %v318, %v316
      %v337 = vpack.c.b16 %v319, %v317
      %v338 = vpack.c.b16 %v322, %v320
      %v339 = vpack.c.b16 %v323, %v321
      %v388 = vunpack.c.l.b16 %v244
      %v389 = vunpack.c.l.b16 %v245
      %v390 = vunpack.c.l.b16 %v246
      %v391 = vunpack.c.l.b16 %v247
      %v392 = vunpack.c.l.b16 %v248
      %v393 = vunpack.c.l.b16 %v249
      %v394 = vunpack.c.l.b16 %v250
      %v395 = vunpack.c.l.b16 %v251
      %v396 = vunpack.c.l.b16 %v252
      %v397 = vunpack.c.l.b16 %v253
      %v398 = vunpack.c.l.b16 %v254
      %v399 = vunpack.c.l.b16 %v255
      %v400 = vunpack.c.l.b16 %v256
      %v401 = vunpack.c.l.b16 %v257
      %v402 = vunpack.c.l.b16 %v258
      %v403 = vunpack.c.l.b16 %v259
      %v404 = vunpack.c.l.b16 %v260
      %v405 = vunpack.c.l.b16 %v261
      %v406 = vunpack.c.l.b16 %v262
      %v407 = vunpack.c.l.b16 %v263
      %v408 = vunpack.c.l.b16 %v264
      %v409 = vunpack.c.l.b16 %v265
      %v410 = vunpack.c.l.b16 %v266
      %v411 = vunpack.c.l.b16 %v267
      %v412 = vunpack.c.l.b16 %v268
      %v413 = vunpack.c.l.b16 %v269
      %v414 = vunpack.c.l.b16 %v270
      %v415 = vunpack.c.l.b16 %v271
      %v416 = vunpack.c.l.b16 %v272
      %v417 = vunpack.c.l.b16 %v273
      %v418 = vunpack.c.l.b16 %v274
      %v419 = vunpack.c.l.b16 %v275
      %v420 = vpack.c.b16 %v389, %v388
      %v421 = vpack.c.b16 %v391, %v390
      %v422 = vpack.c.b16 %v393, %v392
      %v423 = vpack.c.b16 %v395, %v394
      %v424 = vpack.c.b16 %v397, %v396
      %v425 = vpack.c.b16 %v399, %v398
      %v426 = vpack.c.b16 %v401, %v400
      %v427 = vpack.c.b16 %v403, %v402
      %v428 = vpack.c.b16 %v405, %v404
      %v429 = vpack.c.b16 %v407, %v406
      %v430 = vpack.c.b16 %v409, %v408
      %v431 = vpack.c.b16 %v411, %v410
      %v432 = vpack.c.b16 %v413, %v412
      %v433 = vpack.c.b16 %v415, %v414
      %v434 = vpack.c.b16 %v417, %v416
      %v435 = vpack.c.b16 %v419, %v418
      %452 = vmatprep.subr.bf16.mxu0 0
      %453 = vmatpush1.bf16.msra.mxu0 %v420
      %454 = vmatprep.subr.bf16.mxu0 0
      %455 = vmatpush1.bf16.msra.mxu0 %v421
      %456 = vmatprep.subr.bf16.mxu0 0
      %457 = vmatpush1.bf16.msra.mxu0 %v422
      %458 = vmatprep.subr.bf16.mxu0 0
      %459 = vmatpush1.bf16.msra.mxu0 %v423
      %460 = vmatprep.subr.bf16.mxu0 0
      %461 = vmatpush1.bf16.msra.mxu0 %v424
      %462 = vmatprep.subr.bf16.mxu0 0
      %463 = vmatpush1.bf16.msra.mxu0 %v425
      %464 = vmatprep.subr.bf16.mxu0 0
      %465 = vmatpush1.bf16.msra.mxu0 %v426
      %466 = vmatprep.subr.bf16.mxu0 0
      %467 = vmatpush1.bf16.msra.mxu0 %v427
      %468 = vmatprep.subr.bf16.mxu0 0
      %469 = vmatpush1.bf16.msra.mxu0 %v428
      %470 = vmatprep.subr.bf16.mxu0 0
      %471 = vmatpush1.bf16.msra.mxu0 %v429
      %472 = vmatprep.subr.bf16.mxu0 0
      %473 = vmatpush1.bf16.msra.mxu0 %v430
      %474 = vmatprep.subr.bf16.mxu0 0
      %475 = vmatpush1.bf16.msra.mxu0 %v431
      %476 = vmatprep.subr.bf16.mxu0 0
      %477 = vmatpush1.bf16.msra.mxu0 %v432
      %478 = vmatprep.subr.bf16.mxu0 0
      %479 = vmatpush1.bf16.msra.mxu0 %v433
      %480 = vmatprep.subr.bf16.mxu0 0
      %481 = vmatpush1.bf16.msra.mxu0 %v434
      %482 = vmatprep.subr.bf16.mxu0 0
      %483 = vmatpush1.bf16.msra.mxu0 %v435
      %484 = vmatprep.mubr.bf16.mxu0 %v325
      %485 = vmatmul.mubr.bf16.gmra.mrb[0].mxu0 %v324
      %v486 = vpop.f32.mrb[0].mxu0
      %v487 = vadd.f32 0.0, %v486
      %v488 = vpop.f32.mrb[0].mxu0
      %v489 = vpop.f32.mrb[0].mxu0
      %v490 = vadd.f32 0.0, %v489
      %v491 = vpop.f32.mrb[0].mxu0
      %492 = vmatprep.mubr.bf16.mxu0 %v327
      %493 = vmatmul.mubr.bf16.gmra.mrb[0].mxu0 %v326
      %v494 = vpop.f32.mrb[0].mxu0
      %v495 = vadd.f32 0.0, %v494
      %v496 = vpop.f32.mrb[0].mxu0
      %v497 = vpop.f32.mrb[0].mxu0
      %v498 = vadd.f32 0.0, %v497
      %v499 = vpop.f32.mrb[0].mxu0
      %500 = vmatprep.mubr.bf16.mxu0 %v329
      %501 = vmatmul.mubr.bf16.gmra.mrb[0].mxu0 %v328
      %v502 = vpop.f32.mrb[0].mxu0
      %v503 = vadd.f32 0.0, %v502
      %v504 = vpop.f32.mrb[0].mxu0
      %v505 = vpop.f32.mrb[0].mxu0
      %v506 = vadd.f32 0.0, %v505
      %v507 = vpop.f32.mrb[0].mxu0
      %508 = vmatprep.mubr.bf16.mxu0 %v331
      %509 = vmatmul.mubr.bf16.gmra.mrb[0].mxu0 %v330
      %v510 = vpop.f32.mrb[0].mxu0
      %v511 = vadd.f32 0.0, %v510
      %v512 = vpop.f32.mrb[0].mxu0
      %v513 = vpop.f32.mrb[0].mxu0
      %v514 = vadd.f32 0.0, %v513
      %v515 = vpop.f32.mrb[0].mxu0
      %516 = vmatprep.mubr.bf16.mxu0 %v333
      %517 = vmatmul.mubr.bf16.gmra.mrb[0].mxu0 %v332
      %v518 = vpop.f32.mrb[0].mxu0
      %v519 = vadd.f32 0.0, %v518
      %v520 = vpop.f32.mrb[0].mxu0
      %v521 = vpop.f32.mrb[0].mxu0
      %v522 = vadd.f32 0.0, %v521
      %v523 = vpop.f32.mrb[0].mxu0
      %524 = vmatprep.mubr.bf16.mxu0 %v335
      %525 = vmatmul.mubr.bf16.gmra.mrb[0].mxu0 %v334
      %v526 = vpop.f32.mrb[0].mxu0
      %v527 = vadd.f32 0.0, %v526
      %v528 = vpop.f32.mrb[0].mxu0
      %v529 = vpop.f32.mrb[0].mxu0
      %v530 = vadd.f32 0.0, %v529
      %v531 = vpop.f32.mrb[0].mxu0
      %532 = vmatprep.mubr.bf16.mxu0 %v337
      %533 = vmatmul.mubr.bf16.gmra.mrb[0].mxu0 %v336
      %v534 = vpop.f32.mrb[0].mxu0
      %v535 = vadd.f32 0.0, %v534
      %v536 = vpop.f32.mrb[0].mxu0
      %v537 = vpop.f32.mrb[0].mxu0
      %v538 = vadd.f32 0.0, %v537
      %v539 = vpop.f32.mrb[0].mxu0
      %540 = vmatprep.mubr.bf16.mxu0 %v339
      %541 = vmatmul.mubr.bf16.gmra.mrb[0].mxu0 %v338
      %v542 = vpop.f32.mrb[0].mxu0
      %v543 = vadd.f32 0.0, %v542
      %v544 = vpop.f32.mrb[0].mxu0
      %v545 = vpop.f32.mrb[0].mxu0
      %v546 = vadd.f32 0.0, %v545
      %v547 = vpop.f32.mrb[0].mxu0
      %548 = vdwg.mxu0
      %p549 = scmp.eq.s32.totalorder %s19, 0
      // Predicated region
      $region33: #{gcn_without_d_forward.4} parent=31 // pred_check
        %p550 = pneg %p549
      $region34: #{gcn_without_d_forward.4} parent=31 // pred_check_branch
        %552 = sbr.rel (%p550) target = $region36
      $region35: #{gcn_without_d_forward.4} parent=31 // pred_region
        %553 = vst [vmem:[#allocation2] sm:$0xff] %v487
        %554 = vst [vmem:[#allocation2 + $0x8] sm:$0xff] %v490
        %555 = vst [vmem:[#allocation2 + $0x10] sm:$0xff] %v495
        %556 = vst [vmem:[#allocation2 + $0x18] sm:$0xff] %v498
        %557 = vst [vmem:[#allocation2 + $0x20] sm:$0xff] %v503
        %558 = vst [vmem:[#allocation2 + $0x28] sm:$0xff] %v506
        %559 = vst [vmem:[#allocation2 + $0x30] sm:$0xff] %v511
        %560 = vst [vmem:[#allocation2 + $0x38] sm:$0xff] %v514
        %561 = vst [vmem:[#allocation2 + $0x40] sm:$0xff] %v519
        %562 = vst [vmem:[#allocation2 + $0x48] sm:$0xff] %v522
        %563 = vst [vmem:[#allocation2 + $0x50] sm:$0xff] %v527
        %564 = vst [vmem:[#allocation2 + $0x58] sm:$0xff] %v530
        %565 = vst [vmem:[#allocation2 + $0x60] sm:$0xff] %v535
        %566 = vst [vmem:[#allocation2 + $0x68] sm:$0xff] %v538
        %567 = vst [vmem:[#allocation2 + $0x70] sm:$0xff] %v543
        %568 = vst [vmem:[#allocation2 + $0x78] sm:$0xff] %v546
      $region36: #{gcn_without_d_forward.4} parent=31 // pred_fallthru
        _
      %p569 = scmp.ne.s32.totalorder %s19, 0
      // Predicated region
      $region37: #{gcn_without_d_forward.4} parent=31 // pred_check
        %p570 = pneg %p569
      $region38: #{gcn_without_d_forward.4} parent=31 // pred_check_branch
        %572 = sbr.rel (%p570) target = $region40
      $region39: #{gcn_without_d_forward.4} parent=31 // pred_region
        %v573 = vld [vmem:[#allocation2] sm:$0xff]
        %v574 = vld [vmem:[#allocation2 + $0x8] sm:$0xff]
        %v575 = vld [vmem:[#allocation2 + $0x10] sm:$0xff]
        %v576 = vld [vmem:[#allocation2 + $0x18] sm:$0xff]
        %v577 = vld [vmem:[#allocation2 + $0x20] sm:$0xff]
        %v578 = vld [vmem:[#allocation2 + $0x28] sm:$0xff]
        %v579 = vld [vmem:[#allocation2 + $0x30] sm:$0xff]
        %v580 = vld [vmem:[#allocation2 + $0x38] sm:$0xff]
        %v581 = vld [vmem:[#allocation2 + $0x40] sm:$0xff]
        %v582 = vld [vmem:[#allocation2 + $0x48] sm:$0xff]
        %v583 = vld [vmem:[#allocation2 + $0x50] sm:$0xff]
        %v584 = vld [vmem:[#allocation2 + $0x58] sm:$0xff]
        %v585 = vld [vmem:[#allocation2 + $0x60] sm:$0xff]
        %v586 = vld [vmem:[#allocation2 + $0x68] sm:$0xff]
        %v587 = vld [vmem:[#allocation2 + $0x70] sm:$0xff]
        %v588 = vld [vmem:[#allocation2 + $0x78] sm:$0xff]
        %v589 = vadd.f32 %v573, %v487
        %v590 = vadd.f32 %v574, %v490
        %v591 = vadd.f32 %v575, %v495
        %v592 = vadd.f32 %v576, %v498
        %v593 = vadd.f32 %v577, %v503
        %v594 = vadd.f32 %v578, %v506
        %v595 = vadd.f32 %v579, %v511
        %v596 = vadd.f32 %v580, %v514
        %v597 = vadd.f32 %v581, %v519
        %v598 = vadd.f32 %v582, %v522
        %v599 = vadd.f32 %v583, %v527
        %v600 = vadd.f32 %v584, %v530
        %v601 = vadd.f32 %v585, %v535
        %v602 = vadd.f32 %v586, %v538
        %v603 = vadd.f32 %v587, %v543
        %v604 = vadd.f32 %v588, %v546
        %605 = vst [vmem:[#allocation2] sm:$0xff] %v589
        %606 = vst [vmem:[#allocation2 + $0x8] sm:$0xff] %v590
        %607 = vst [vmem:[#allocation2 + $0x10] sm:$0xff] %v591
        %608 = vst [vmem:[#allocation2 + $0x18] sm:$0xff] %v592
        %609 = vst [vmem:[#allocation2 + $0x20] sm:$0xff] %v593
        %610 = vst [vmem:[#allocation2 + $0x28] sm:$0xff] %v594
        %611 = vst [vmem:[#allocation2 + $0x30] sm:$0xff] %v595
        %612 = vst [vmem:[#allocation2 + $0x38] sm:$0xff] %v596
        %613 = vst [vmem:[#allocation2 + $0x40] sm:$0xff] %v597
        %614 = vst [vmem:[#allocation2 + $0x48] sm:$0xff] %v598
        %615 = vst [vmem:[#allocation2 + $0x50] sm:$0xff] %v599
        %616 = vst [vmem:[#allocation2 + $0x58] sm:$0xff] %v600
        %617 = vst [vmem:[#allocation2 + $0x60] sm:$0xff] %v601
        %618 = vst [vmem:[#allocation2 + $0x68] sm:$0xff] %v602
        %619 = vst [vmem:[#allocation2 + $0x70] sm:$0xff] %v603
        %620 = vst [vmem:[#allocation2 + $0x78] sm:$0xff] %v604
      $region40: #{gcn_without_d_forward.4} parent=31 // pred_fallthru
        _
      // Predicated region
      $region41: #{gcn_without_d_forward.4} parent=31 // pred_check
        %p621 = pneg %p549
      $region42: #{gcn_without_d_forward.4} parent=31 // pred_check_branch
        %623 = sbr.rel (%p621) target = $region44
      $region43: #{gcn_without_d_forward.4} parent=31 // pred_region
        %v624 = vld [vmem:[#allocation2] sm:$0xff]
        %v625 = vld [vmem:[#allocation2 + $0x8] sm:$0xff]
        %v626 = vld [vmem:[#allocation2 + $0x10] sm:$0xff]
        %v627 = vld [vmem:[#allocation2 + $0x18] sm:$0xff]
        %v628 = vld [vmem:[#allocation2 + $0x20] sm:$0xff]
        %v629 = vld [vmem:[#allocation2 + $0x28] sm:$0xff]
        %v630 = vld [vmem:[#allocation2 + $0x30] sm:$0xff]
        %v631 = vld [vmem:[#allocation2 + $0x38] sm:$0xff]
        %v632 = vld [vmem:[#allocation2 + $0x40] sm:$0xff]
        %v633 = vld [vmem:[#allocation2 + $0x48] sm:$0xff]
        %v634 = vld [vmem:[#allocation2 + $0x50] sm:$0xff]
        %v635 = vld [vmem:[#allocation2 + $0x58] sm:$0xff]
        %v636 = vld [vmem:[#allocation2 + $0x60] sm:$0xff]
        %v637 = vld [vmem:[#allocation2 + $0x68] sm:$0xff]
        %v638 = vld [vmem:[#allocation2 + $0x70] sm:$0xff]
        %v639 = vld [vmem:[#allocation2 + $0x78] sm:$0xff]
        %v640 = vmax.f32 %v624, 0.0
        %v641 = vmax.f32 %v625, 0.0
        %v642 = vmax.f32 %v626, 0.0
        %v643 = vmax.f32 %v627, 0.0
        %v644 = vmax.f32 %v628, 0.0
        %v645 = vmax.f32 %v629, 0.0
        %v646 = vmax.f32 %v630, 0.0
        %v647 = vmax.f32 %v631, 0.0
        %v648 = vmax.f32 %v632, 0.0
        %v649 = vmax.f32 %v633, 0.0
        %v650 = vmax.f32 %v634, 0.0
        %v651 = vmax.f32 %v635, 0.0
        %v652 = vmax.f32 %v636, 0.0
        %v653 = vmax.f32 %v637, 0.0
        %v654 = vmax.f32 %v638, 0.0
        %v655 = vmax.f32 %v639, 0.0
        %v656 = vpack.c.bf16 %v641, %v640
        %v657 = vpack.c.bf16 %v643, %v642
        %v658 = vpack.c.bf16 %v645, %v644
        %v659 = vpack.c.bf16 %v647, %v646
        %v660 = vpack.c.bf16 %v649, %v648
        %v661 = vpack.c.bf16 %v651, %v650
        %v662 = vpack.c.bf16 %v653, %v652
        %v663 = vpack.c.bf16 %v655, %v654
        %v664 = vld [vmem:[%s2] sm:$0xf]
        %v665 = vld [vmem:[%s2 + $0x4] sm:$0xf]
        %v666 = vld [vmem:[%s2 + $0x8] sm:$0xf]
        %v667 = vld [vmem:[%s2 + $0xc] sm:$0xf]
        %v668 = vld [vmem:[%s2 + $0x10] sm:$0xf]
        %v669 = vld [vmem:[%s2 + $0x14] sm:$0xf]
        %v670 = vld [vmem:[%s2 + $0x18] sm:$0xf]
        %v671 = vld [vmem:[%s2 + $0x1c] sm:$0xf]
        %v672 = vld [vmem:[%s2 + $0x20] sm:$0xf]
        %v673 = vld [vmem:[%s2 + $0x24] sm:$0xf]
        %v674 = vld [vmem:[%s2 + $0x28] sm:$0xf]
        %v675 = vld [vmem:[%s2 + $0x2c] sm:$0xf]
        %v676 = vld [vmem:[%s2 + $0x30] sm:$0xf]
        %v677 = vld [vmem:[%s2 + $0x34] sm:$0xf]
        %v678 = vld [vmem:[%s2 + $0x38] sm:$0xf]
        %v679 = vld [vmem:[%s2 + $0x3c] sm:$0xf]
        %v696 = vunpack.c.l.b16 %v664
        %v697 = vunpack.c.l.b16 %v665
        %v698 = vunpack.c.l.b16 %v666
        %v699 = vunpack.c.l.b16 %v667
        %v700 = vunpack.c.l.b16 %v668
        %v701 = vunpack.c.l.b16 %v669
        %v702 = vunpack.c.l.b16 %v670
        %v703 = vunpack.c.l.b16 %v671
        %v704 = vunpack.c.l.b16 %v672
        %v705 = vunpack.c.l.b16 %v673
        %v706 = vunpack.c.l.b16 %v674
        %v707 = vunpack.c.l.b16 %v675
        %v708 = vunpack.c.l.b16 %v676
        %v709 = vunpack.c.l.b16 %v677
        %v710 = vunpack.c.l.b16 %v678
        %v711 = vunpack.c.l.b16 %v679
        %v712 = vpack.c.b16 %v697, %v696
        %v713 = vpack.c.b16 %v699, %v698
        %v714 = vpack.c.b16 %v701, %v700
        %v715 = vpack.c.b16 %v703, %v702
        %v716 = vpack.c.b16 %v705, %v704
        %v717 = vpack.c.b16 %v707, %v706
        %v718 = vpack.c.b16 %v709, %v708
        %v719 = vpack.c.b16 %v711, %v710
        %728 = vmatprep.subr.bf16.mxu0 0
        %729 = vmatpush1.bf16.msra.mxu0 %v712
        %730 = vmatprep.subr.bf16.mxu0 0
        %731 = vmatpush1.bf16.msra.mxu0 %v713
        %732 = vmatprep.subr.bf16.mxu0 0
        %733 = vmatpush1.bf16.msra.mxu0 %v714
        %734 = vmatprep.subr.bf16.mxu0 0
        %735 = vmatpush1.bf16.msra.mxu0 %v715
        %736 = vmatprep.subr.bf16.mxu0 0
        %737 = vmatpush1.bf16.msra.mxu0 %v716
        %738 = vmatprep.subr.bf16.mxu0 0
        %739 = vmatpush1.bf16.msra.mxu0 %v717
        %740 = vmatprep.subr.bf16.mxu0 0
        %741 = vmatpush1.bf16.msra.mxu0 %v718
        %742 = vmatprep.subr.bf16.mxu0 0
        %743 = vmatpush1.bf16.msra.mxu0 %v719
        %744 = vmatprep.subr.bf16.mxu0 0
        %745 = vmatpush1.bf16.msra.mxu0 0
        %746 = vmatprep.subr.bf16.mxu0 0
        %747 = vmatpush1.bf16.msra.mxu0 0
        %748 = vmatprep.subr.bf16.mxu0 0
        %749 = vmatpush1.bf16.msra.mxu0 0
        %750 = vmatprep.subr.bf16.mxu0 0
        %751 = vmatpush1.bf16.msra.mxu0 0
        %752 = vmatprep.subr.bf16.mxu0 0
        %753 = vmatpush1.bf16.msra.mxu0 0
        %754 = vmatprep.subr.bf16.mxu0 0
        %755 = vmatpush1.bf16.msra.mxu0 0
        %756 = vmatprep.subr.bf16.mxu0 0
        %757 = vmatpush1.bf16.msra.mxu0 0
        %758 = vmatprep.subr.bf16.mxu0 0
        %759 = vmatpush1.bf16.msra.mxu0 0
        %760 = vmatprep.mubr.bf16.mxu0 0
        %761 = vmatmul.mubr.bf16.gmra.mrb[0].mxu0 %v656
        %v762 = vpop.f32.mrb[0].mxu0
        %v763 = vadd.f32 0.0, %v762
        %v764 = vpop.f32.mrb[0].mxu0
        %v765 = vpop.f32.mrb[0].mxu0
        %v766 = vadd.f32 0.0, %v765
        %v767 = vpop.f32.mrb[0].mxu0
        %768 = vmatprep.mubr.bf16.mxu0 0
        %769 = vmatmul.mubr.bf16.gmra.mrb[0].mxu0 %v657
        %v770 = vpop.f32.mrb[0].mxu0
        %v771 = vadd.f32 0.0, %v770
        %v772 = vpop.f32.mrb[0].mxu0
        %v773 = vpop.f32.mrb[0].mxu0
        %v774 = vadd.f32 0.0, %v773
        %v775 = vpop.f32.mrb[0].mxu0
        %776 = vmatprep.mubr.bf16.mxu0 0
        %777 = vmatmul.mubr.bf16.gmra.mrb[0].mxu0 %v658
        %v778 = vpop.f32.mrb[0].mxu0
        %v779 = vadd.f32 0.0, %v778
        %v780 = vpop.f32.mrb[0].mxu0
        %v781 = vpop.f32.mrb[0].mxu0
        %v782 = vadd.f32 0.0, %v781
        %v783 = vpop.f32.mrb[0].mxu0
        %784 = vmatprep.mubr.bf16.mxu0 0
        %785 = vmatmul.mubr.bf16.gmra.mrb[0].mxu0 %v659
        %v786 = vpop.f32.mrb[0].mxu0
        %v787 = vadd.f32 0.0, %v786
        %v788 = vpop.f32.mrb[0].mxu0
        %v789 = vpop.f32.mrb[0].mxu0
        %v790 = vadd.f32 0.0, %v789
        %v791 = vpop.f32.mrb[0].mxu0
        %792 = vmatprep.mubr.bf16.mxu0 0
        %793 = vmatmul.mubr.bf16.gmra.mrb[0].mxu0 %v660
        %v794 = vpop.f32.mrb[0].mxu0
        %v795 = vadd.f32 0.0, %v794
        %v796 = vpop.f32.mrb[0].mxu0
        %v797 = vpop.f32.mrb[0].mxu0
        %v798 = vadd.f32 0.0, %v797
        %v799 = vpop.f32.mrb[0].mxu0
        %800 = vmatprep.mubr.bf16.mxu0 0
        %801 = vmatmul.mubr.bf16.gmra.mrb[0].mxu0 %v661
        %v802 = vpop.f32.mrb[0].mxu0
        %v803 = vadd.f32 0.0, %v802
        %v804 = vpop.f32.mrb[0].mxu0
        %v805 = vpop.f32.mrb[0].mxu0
        %v806 = vadd.f32 0.0, %v805
        %v807 = vpop.f32.mrb[0].mxu0
        %808 = vmatprep.mubr.bf16.mxu0 0
        %809 = vmatmul.mubr.bf16.gmra.mrb[0].mxu0 %v662
        %v810 = vpop.f32.mrb[0].mxu0
        %v811 = vadd.f32 0.0, %v810
        %v812 = vpop.f32.mrb[0].mxu0
        %v813 = vpop.f32.mrb[0].mxu0
        %v814 = vadd.f32 0.0, %v813
        %v815 = vpop.f32.mrb[0].mxu0
        %816 = vmatprep.mubr.bf16.mxu0 0
        %817 = vmatmul.mubr.bf16.gmra.mrb[0].mxu0 %v663
        %v818 = vpop.f32.mrb[0].mxu0
        %v819 = vadd.f32 0.0, %v818
        %v820 = vpop.f32.mrb[0].mxu0
        %v821 = vpop.f32.mrb[0].mxu0
        %v822 = vadd.f32 0.0, %v821
        %v823 = vpop.f32.mrb[0].mxu0
        %824 = vdwg.mxu0
        %v825 = vpack.c.bf16 %v766, %v763
        %v826 = vpack.c.bf16 %v774, %v771
        %v827 = vpack.c.bf16 %v782, %v779
        %v828 = vpack.c.bf16 %v790, %v787
        %v829 = vpack.c.bf16 %v798, %v795
        %v830 = vpack.c.bf16 %v806, %v803
        %v831 = vpack.c.bf16 %v814, %v811
        %v832 = vpack.c.bf16 %v822, %v819
        %v841 = vunpack.c.l.b16 %v825
        %v842 = vunpack.c.h.b16 %v825
        %v843 = vunpack.c.l.b16 %v826
        %v844 = vunpack.c.h.b16 %v826
        %v845 = vunpack.c.l.b16 %v827
        %v846 = vunpack.c.h.b16 %v827
        %v847 = vunpack.c.l.b16 %v828
        %v848 = vunpack.c.h.b16 %v828
        %v849 = vunpack.c.l.b16 %v829
        %v850 = vunpack.c.h.b16 %v829
        %v851 = vunpack.c.l.b16 %v830
        %v852 = vunpack.c.h.b16 %v830
        %v853 = vunpack.c.l.b16 %v831
        %v854 = vunpack.c.h.b16 %v831
        %v855 = vunpack.c.l.b16 %v832
        %v856 = vunpack.c.h.b16 %v832
        %v857 = vpack.c.b16 %v841, %v841
        %v858 = vpack.c.b16 %v842, %v842
        %v859 = vpack.c.b16 %v843, %v843
        %v860 = vpack.c.b16 %v844, %v844
        %v861 = vpack.c.b16 %v845, %v845
        %v862 = vpack.c.b16 %v846, %v846
        %v863 = vpack.c.b16 %v847, %v847
        %v864 = vpack.c.b16 %v848, %v848
        %v865 = vpack.c.b16 %v849, %v849
        %v866 = vpack.c.b16 %v850, %v850
        %v867 = vpack.c.b16 %v851, %v851
        %v868 = vpack.c.b16 %v852, %v852
        %v869 = vpack.c.b16 %v853, %v853
        %v870 = vpack.c.b16 %v854, %v854
        %v871 = vpack.c.b16 %v855, %v855
        %v872 = vpack.c.b16 %v856, %v856
        %889 = vst [vmem:[%s225] sm:$0xf] %v857
        %890 = vst [vmem:[%s225 + $0x4] sm:$0xf] %v858
        %891 = vst [vmem:[%s225 + $0x8] sm:$0xf] %v859
        %892 = vst [vmem:[%s225 + $0xc] sm:$0xf] %v860
        %893 = vst [vmem:[%s225 + $0x10] sm:$0xf] %v861
        %894 = vst [vmem:[%s225 + $0x14] sm:$0xf] %v862
        %895 = vst [vmem:[%s225 + $0x18] sm:$0xf] %v863
        %896 = vst [vmem:[%s225 + $0x1c] sm:$0xf] %v864
        %897 = vst [vmem:[%s225 + $0x20] sm:$0xf] %v865
        %898 = vst [vmem:[%s225 + $0x24] sm:$0xf] %v866
        %899 = vst [vmem:[%s225 + $0x28] sm:$0xf] %v867
        %900 = vst [vmem:[%s225 + $0x2c] sm:$0xf] %v868
        %901 = vst [vmem:[%s225 + $0x30] sm:$0xf] %v869
        %902 = vst [vmem:[%s225 + $0x34] sm:$0xf] %v870
        %903 = vst [vmem:[%s225 + $0x38] sm:$0xf] %v871
        %904 = vst [vmem:[%s225 + $0x3c] sm:$0xf] %v872
      $region44: #{gcn_without_d_forward.4} parent=31 // pred_fallthru
        _
      %s905 = smul.u32 16, %s18
      %p906 = scmp.lt.s32.totalorder %s905, 31
      %s907 = scalar_select %p906, %s905, 31
      %s908 = smul.addr %s907, 4
      %s909 = scalar_lea.vmem %s3, %s908
      // Predicated region
      $region45: #{gcn_without_d_forward.4} parent=31 // pred_check
        %p910 = pneg %p119
      $region46: #{gcn_without_d_forward.4} parent=31 // pred_check_branch
        %912 = sbr.rel (%p910) target = $region48
      $region47: #{gcn_without_d_forward.4} parent=31 // pred_region
        %s913 = smul.u32 16, %s18
      $region48: #{gcn_without_d_forward.4} parent=31 // pred_fallthru
        _
    $region32: #{gcn_without_d_forward.4} parent=5 // pred_fallthru
      _
    %p914 = scmp.le.s32.totalorder 2, %s9
    // Predicated region
    $region49: #{gcn_without_d_forward.4} parent=5 // pred_check
      %p915 = pneg %p914
    $region50: #{gcn_without_d_forward.4} parent=5 // pred_check_branch
      %917 = sbr.rel (%p915) target = $region52
    $region51: #{gcn_without_d_forward.4} parent=5 // pred_region
      %s918 = ssub.s32 %s9, 2
      // Predicated region
      $region53: #{gcn_without_d_forward.4} parent=51 // pred_check
        %p919 = pneg %p125
      $region54: #{gcn_without_d_forward.4} parent=51 // pred_check_branch
        %921 = sbr.rel (%p919) target = $region56
      $region55: #{gcn_without_d_forward.4} parent=51 // pred_region
        %s922 = smul.u32 16, %s20
        %p923 = scmp.lt.s32.totalorder %s922, 31
        %s924 = scalar_select %p923, %s922, 31
        %s925 = smul.addr %s924, 4
        %s926 = scalar_lea.vmem %s3, %s925
      $region56: #{gcn_without_d_forward.4} parent=51 // pred_fallthru
        _
    $region52: #{gcn_without_d_forward.4} parent=5 // pred_fallthru
      _
  $region6: #{gcn_without_d_forward.4} parent=0 // loop_footer
    %s13 = sadd.s32 1, %s9
  $region7: #{gcn_without_d_forward.4} parent=0 // loop_footer_branch
    %8 = sbr.rel target = $region3
  $region8: #{gcn_without_d_forward.4} parent=0 // loop_exit
    _

</llo_original>
